<compile_context>
chip_gen: v5e
topology: v5e:2x2
jax: 0.10.0
libtpu: 0.0.40
codegen_flags: <defaults>
</compile_context>

<pallas_src>
import functools

import jax
import jax.numpy as jnp
from jax.experimental import pallas as pl
from jax.experimental.pallas import tpu as pltpu

IN_DIM = 2
HIDDEN_DIM = 128
OUTPUT_DIM = 4096


def _round_up(x, n):
    return ((x + n - 1) // n) * n


def _space_warp_kernel(coords_ref, w1_ref, b1_ref, w2_ref, b2_ref, out_ref):
    x = coords_ref[...]          # (tm, IN_DIM)          f32
    w1 = w1_ref[...]             # (IN_DIM, HIDDEN)      f32
    b1 = b1_ref[...]             # (1, HIDDEN)           f32

    # Layer 1 on the VPU: K=IN_DIM is tiny -> broadcast FMAs beat an MXU matmul.
    h = x[:, 0:1] * w1[0:1, :] + b1
    for k in range(1, w1.shape[0]):
        h = h + x[:, k:k + 1] * w1[k:k + 1, :]
    h = jnp.maximum(h, 0.0)

    # Layer 2 on the MXU: bf16 operands, f32 accumulation.
    o = jnp.dot(h.astype(jnp.bfloat16), w2_ref[...],
                preferred_element_type=jnp.float32)

    # Epilogue in the output dtype (bf16 add on v6e/v7x when emitting bf16).
    out_ref[...] = (o.astype(out_ref.dtype) + b2_ref[...]).astype(out_ref.dtype)


def prepare_params(w1, b1, w2, b2, out_dtype=jnp.bfloat16):
    """One-time cast/reshape of weights into kernel dtypes/layouts.

    Call once at init so repeated inference does not pay the re-cast (an extra
    XLA op + ~1-2 MiB of HBM traffic) on every call.  The output dtype of the
    kernel is taken from b2's dtype (bf16 by default; pass jnp.float32 for the
    module's exact f32 output).
    """
    in_dim, hidden = w1.shape
    hidden2, out_dim = w2.shape
    assert hidden == hidden2 and b1.size == hidden and b2.size == out_dim
    return (jnp.asarray(w1, jnp.float32),
            jnp.asarray(b1, jnp.float32).reshape(1, hidden),
            jnp.asarray(w2, jnp.bfloat16),
            jnp.asarray(b2, out_dtype).reshape(1, out_dim))


@functools.partial(jax.jit, static_argnames=("tile_m",))
def space_warp(coords, w1, b1, w2, b2, *, tile_m=1024):
    """coords: (..., in_dim) -> (..., out_dim), dtype = b2.dtype (default bf16)."""
    assert tile_m % 8 == 0
    orig_shape = coords.shape
    in_dim, hidden = w1.shape
    out_dim = w2.shape[1]
    assert orig_shape[-1] == in_dim
    out_dtype = b2.dtype
    out_bytes = jnp.dtype(out_dtype).itemsize

    x = coords.reshape(-1, in_dim).astype(jnp.float32)
    m = x.shape[0]

    # Row tiling:
    #  * multiple of 8 (sublanes), capped at tile_m,
    #  * for moderate/large m, cap tm so the grid has >= 2 steps (v7x megacore
    #    + compute/writeback overlap); multiples of 256 keep MXU/store shapes
    #    clean in the multi-step case.
    m_rounded = _round_up(max(m, 1), 8)
    if m_rounded >= 512:
        tm_cap = _round_up((m_rounded + 1) // 2, 256)
    else:
        tm_cap = m_rounded
    tm = min(tile_m, tm_cap)
    m_pad = _round_up(m_rounded, tm)
    if m_pad != m:
        x = jnp.pad(x, ((0, m_pad - m), (0, 0)))
    grid = (m_pad // tm,)

    # VMEM budget (double-buffered coords + output, resident weights) + headroom.
    vmem_needed = (
        2 * tm * out_dim * out_bytes          # output tile, double-buffered
        + 2 * tm * 128 * 4                    # coords tile (lane-padded to 128)
        + 2 * hidden * out_dim * 2            # W2 (bf16), double-buffered
        + 2 * (8 * 128 * 4 + hidden * 4 + out_dim * out_bytes)  # W1, b1, b2
    )
    vmem_limit = max(32 * 1024 * 1024, vmem_needed + 8 * 1024 * 1024)

    cost = pl.CostEstimate(
        flops=2 * m_pad * hidden * out_dim + 4 * m_pad * hidden,
        transcendentals=0,
        bytes_accessed=(m_pad * in_dim * 4
                        + w1.size * 4 + b1.size * 4
                        + w2.size * 2 + b2.size * out_bytes
                        + m_pad * out_dim * out_bytes),
    )

    out = pl.pallas_call(
        _space_warp_kernel,
        out_shape=jax.ShapeDtypeStruct((m_pad, out_dim), out_dtype),
        grid_spec=pltpu.PrefetchScalarGridSpec(
            num_scalar_prefetch=0,
            grid=grid,
            in_specs=[
                pl.BlockSpec((tm, in_dim), lambda i: (i, 0)),       # coords row tile
                pl.BlockSpec((in_dim, hidden), lambda i: (0, 0)),   # W1 (resident)
                pl.BlockSpec((1, hidden), lambda i: (0, 0)),        # b1 (resident)
                pl.BlockSpec((hidden, out_dim), lambda i: (0, 0)),  # W2 (resident, bf16)
                pl.BlockSpec((1, out_dim), lambda i: (0, 0)),       # b2 (resident)
            ],
            out_specs=pl.BlockSpec((tm, out_dim), lambda i: (i, 0)),
        ),
        compiler_params=pltpu.CompilerParams(
            dimension_semantics=("parallel",),   # M tiles shard across v7x cores
            vmem_limit_bytes=int(vmem_limit),
        ),
        cost_estimate=cost,
    )(x, w1, b1, w2, b2)

    out = out[:m]
    return out.reshape(*orig_shape[:-1], out_dim)


def reference_f32(coords, w1, b1, w2, b2):
    h = jnp.maximum(coords @ w1 + b1, 0.0)
    return h @ w2 + b2


def reference_bf16(coords, w1, b1, w2, b2):
    # Matches the kernel's matmul numerics: bf16 operands, f32 accumulate.
    h = jnp.maximum(coords @ w1 + b1, 0.0)
    o = jnp.dot(h.astype(jnp.bfloat16), w2.astype(jnp.bfloat16),
                preferred_element_type=jnp.float32)
    return o + b2


if __name__ == "__main__":
    key = jax.random.PRNGKey(0)
    kp, kc1, kc2 = jax.random.split(key, 3)
    k1, k2, k3, k4 = jax.random.split(kp, 4)

    # NOTE: the PyTorch module zero-inits everything ("pass-through init"),
    # which makes correctness trivially all-zeros.  Use deterministic nonzero
    # weights of the same shapes to exercise the kernel; zero-init is also
    # checked below.
    w1 = jax.random.normal(k1, (IN_DIM, HIDDEN_DIM), jnp.float32) * 0.1
    b1 = jax.random.normal(k2, (HIDDEN_DIM,), jnp.float32) * 0.1
    w2 = jax.random.normal(k3, (HIDDEN_DIM, OUTPUT_DIM), jnp.float32) * 0.1
    b2 = jax.random.normal(k4, (OUTPUT_DIM,), jnp.float32) * 0.1

    # --- small shape: batch=2, seq=8 points of (x, y) coords -------------
    coords = jax.random.uniform(kc1, (2, 8, IN_DIM), jnp.float32)

    params_bf16 = prepare_params(w1, b1, w2, b2)              # bf16 output (default)
    out = jax.block_until_ready(space_warp(coords, *params_bf16))
    assert out.shape == (2, 8, OUTPUT_DIM), out.shape
    assert out.dtype == jnp.bfloat16

    ref_bf = reference_bf16(coords, w1, b1, w2, b2)
    ref_f32 = reference_f32(coords, w1, b1, w2, b2)
    out_f = out.astype(jnp.float32)
    assert jnp.allclose(out_f, ref_bf, atol=1e-2, rtol=1e-2), float(
        jnp.max(jnp.abs(out_f - ref_bf)))
    assert jnp.allclose(out_f, ref_f32, atol=3e-2, rtol=3e-2), float(
        jnp.max(jnp.abs(out_f - ref_f32)))

    # --- f32 output path (exact PyTorch output dtype) ---------------------
    params_f32 = prepare_params(w1, b1, w2, b2, out_dtype=jnp.float32)
    out32 = jax.block_until_ready(space_warp(coords, *params_f32))
    assert out32.dtype == jnp.float32
    assert jnp.allclose(out32, ref_bf, atol=1e-3, rtol=1e-3), float(
        jnp.max(jnp.abs(out32 - ref_bf)))

    # --- moderate shape: exercises >=2 grid steps + tail-row padding ------
    coords_big = jax.random.uniform(kc2, (1000, IN_DIM), jnp.float32)
    out_big = jax.block_until_ready(space_warp(coords_big, *params_bf16))
    assert out_big.shape == (1000, OUTPUT_DIM)
    ref_big = reference_bf16(coords_big, w1, b1, w2, b2)
    assert jnp.allclose(out_big.astype(jnp.float32), ref_big,
                        atol=1e-2, rtol=1e-2)

    # --- module's actual zero ("pass-through") init: output == 0 ----------
    zp = prepare_params(jnp.zeros_like(w1), jnp.zeros_like(b1),
                        jnp.zeros_like(w2), jnp.zeros_like(b2))
    z = jax.block_until_ready(space_warp(coords, *zp))
    assert jnp.all(z == 0.0)

    print("KERNEL_OK")
</pallas_src>

<mosaic_0001>
module attributes {stable_mosaic.version = 11 : i64} {
  func.func @_space_warp_kernel(%arg0: i32, %arg1: memref<16x2xf32, #tpu.memory_space<vmem>>, %arg2: memref<2x128xf32, #tpu.memory_space<vmem>>, %arg3: memref<1x128xf32, #tpu.memory_space<vmem>>, %arg4: memref<128x4096xbf16, #tpu.memory_space<vmem>>, %arg5: memref<1x4096xbf16, #tpu.memory_space<vmem>>, %arg6: memref<16x4096xbf16, #tpu.memory_space<vmem>>) attributes {dimension_semantics = [#tpu.dimension_semantics<parallel>], iteration_bounds = array<i64: 1>, scalar_prefetch = 0 : i64, scratch_operands = 0 : i64, tpu.core_type = #tpu.core_type<tc>, window_params = [{transform_indices = @transform_0, window_bounds = array<i64: 16, 2>}, {pipeline_mode = #tpu.pipeline_mode<synchronous>, transform_indices = @transform_1, window_bounds = array<i64: 2, 128>}, {pipeline_mode = #tpu.pipeline_mode<synchronous>, transform_indices = @transform_2, window_bounds = array<i64: 1, 128>}, {pipeline_mode = #tpu.pipeline_mode<synchronous>, transform_indices = @transform_3, window_bounds = array<i64: 128, 4096>}, {pipeline_mode = #tpu.pipeline_mode<synchronous>, transform_indices = @transform_4, window_bounds = array<i64: 1, 4096>}, {transform_indices = @transform_5, window_bounds = array<i64: 16, 4096>}]} {
    %c0 = arith.constant 0 : index
    %c0_0 = arith.constant 0 : index
    %0 = vector.load %arg1[%c0, %c0_0] : memref<16x2xf32, #tpu.memory_space<vmem>>, vector<16x2xf32>
    %c0_1 = arith.constant 0 : index
    %c0_2 = arith.constant 0 : index
    %1 = vector.load %arg2[%c0_1, %c0_2] : memref<2x128xf32, #tpu.memory_space<vmem>>, vector<2x128xf32>
    %c0_3 = arith.constant 0 : index
    %c0_4 = arith.constant 0 : index
    %2 = vector.load %arg3[%c0_3, %c0_4] : memref<1x128xf32, #tpu.memory_space<vmem>>, vector<1x128xf32>
    %3 = vector.extract_strided_slice %0 {offsets = [0, 0], sizes = [16, 1], strides = [1, 1]} : vector<16x2xf32> to vector<16x1xf32>
    %4 = vector.extract_strided_slice %1 {offsets = [0, 0], sizes = [1, 128], strides = [1, 1]} : vector<2x128xf32> to vector<1x128xf32>
    %5 = vector.broadcast %3 : vector<16x1xf32> to vector<16x128xf32>
    %6 = vector.broadcast %4 : vector<1x128xf32> to vector<16x128xf32>
    %7 = arith.mulf %5, %6 : vector<16x128xf32>
    %8 = vector.broadcast %2 : vector<1x128xf32> to vector<16x128xf32>
    %9 = arith.addf %7, %8 : vector<16x128xf32>
    %10 = vector.extract_strided_slice %0 {offsets = [0, 1], sizes = [16, 1], strides = [1, 1]} : vector<16x2xf32> to vector<16x1xf32>
    %11 = vector.extract_strided_slice %1 {offsets = [1, 0], sizes = [1, 128], strides = [1, 1]} : vector<2x128xf32> to vector<1x128xf32>
    %12 = vector.broadcast %10 : vector<16x1xf32> to vector<16x128xf32>
    %13 = vector.broadcast %11 : vector<1x128xf32> to vector<16x128xf32>
    %14 = arith.mulf %12, %13 : vector<16x128xf32>
    %15 = arith.addf %9, %14 : vector<16x128xf32>
    %cst = arith.constant 0.000000e+00 : f32
    %16 = vector.broadcast %cst : f32 to vector<16x128xf32>
    %17 = arith.maximumf %15, %16 : vector<16x128xf32>
    %18 = arith.truncf %17 : vector<16x128xf32> to vector<16x128xbf16>
    %c0_5 = arith.constant 0 : index
    %c0_6 = arith.constant 0 : index
    %19 = vector.load %arg4[%c0_5, %c0_6] : memref<128x4096xbf16, #tpu.memory_space<vmem>>, vector<128x4096xbf16>
    %cst_7 = arith.constant dense<0.000000e+00> : vector<16x4096xf32>
    %20 = tpu.matmul %18, %19, %cst_7 {dimension_numbers = #tpu.dot_dimension_numbers<[1], [0], [0], [1], [0, 0, 1, 1], [], []>} : vector<16x128xbf16>, vector<128x4096xbf16>, vector<16x4096xf32> -> vector<16x4096xf32>
    %21 = arith.truncf %20 : vector<16x4096xf32> to vector<16x4096xbf16>
    %c0_8 = arith.constant 0 : index
    %c0_9 = arith.constant 0 : index
    %22 = vector.load %arg5[%c0_8, %c0_9] : memref<1x4096xbf16, #tpu.memory_space<vmem>>, vector<1x4096xbf16>
    %23 = vector.broadcast %22 : vector<1x4096xbf16> to vector<16x4096xbf16>
    %24 = arith.addf %21, %23 : vector<16x4096xbf16>
    %c0_10 = arith.constant 0 : index
    %c0_11 = arith.constant 0 : index
    %25 = vector.load %arg6[%c0_10, %c0_11] : memref<16x4096xbf16, #tpu.memory_space<vmem>>, vector<16x4096xbf16>
    tpu.vector_store %arg6[%c0_10, %c0_11], %24 {strides = array<i32>} : memref<16x4096xbf16, #tpu.memory_space<vmem>>, vector<16x4096xbf16>,
    return
  }
  func.func @transform_0(%arg0: i32) -> (i32, i32) {
    %c0_i32 = arith.constant 0 : i32
    %c0_i32_0 = arith.constant 0 : i32
    return %arg0, %c0_i32 : i32, i32
  }
  func.func @transform_1(%arg0: i32) -> (i32, i32) {
    %c0_i32 = arith.constant 0 : i32
    %c0_i32_0 = arith.constant 0 : i32
    %c0_i32_1 = arith.constant 0 : i32
    return %c0_i32, %c0_i32_0 : i32, i32
  }
  func.func @transform_2(%arg0: i32) -> (i32, i32) {
    %c0_i32 = arith.constant 0 : i32
    %c0_i32_0 = arith.constant 0 : i32
    %c0_i32_1 = arith.constant 0 : i32
    return %c0_i32, %c0_i32_0 : i32, i32
  }
  func.func @transform_3(%arg0: i32) -> (i32, i32) {
    %c0_i32 = arith.constant 0 : i32
    %c0_i32_0 = arith.constant 0 : i32
    %c0_i32_1 = arith.constant 0 : i32
    return %c0_i32, %c0_i32_0 : i32, i32
  }
  func.func @transform_4(%arg0: i32) -> (i32, i32) {
    %c0_i32 = arith.constant 0 : i32
    %c0_i32_0 = arith.constant 0 : i32
    %c0_i32_1 = arith.constant 0 : i32
    return %c0_i32, %c0_i32_0 : i32, i32
  }
  func.func @transform_5(%arg0: i32) -> (i32, i32) {
    %c0_i32 = arith.constant 0 : i32
    %c0_i32_0 = arith.constant 0 : i32
    return %arg0, %c0_i32 : i32, i32
  }
}

</mosaic_0001>

<llo_original>
// kernel: space_warp.1
$region0: #{space_warp.1}
  #allocation0 [shape = 'u32[]', space=smem, size = 0x4, offset = 0x4, fixed_abs, tag = 'smem constant byte address 0x4 - core index']
  #allocation1 [shape = 'u32[72,128]{1,0:T(1,128)}', space=vmem, size = 0x9000, scoped, tag = 'internal scratch']
  %s0 = inlined_call_operand.vmem [shape: f32[16,2], index: 0, kind: input, shape index: {}]
  %s1 = inlined_call_operand.vmem [shape: f32[2,128], index: 1, kind: input, shape index: {}]
  %s2 = inlined_call_operand.vmem [shape: f32[1,128], index: 2, kind: input, shape index: {}]
  %s3 = inlined_call_operand.hbm [shape: bf16[128,4096], index: 3, kind: input, shape index: {}]
  %s4 = inlined_call_operand.hbm [shape: bf16[1,4096], index: 4, kind: input, shape index: {}]
  %s5 = inlined_call_operand.hbm [shape: bf16[16,4096], index: 5, kind: output, shape index: {}]
  %s6 = sld [smem:[#allocation0]]
  $region38: #{space_warp.1} parent=0
    _
  %s8 = ssub.s32 1, %s6
  %s9 = scalar_select 0, %s8, %s6
  $region1: #{space_warp.1} parent=0
    #allocation2 [shape = 'u8[1048576]{0}', space=vmem, size = 0x100000, scoped, tag = 'input window, operand 3, single buffered']
    #allocation3 [shape = 's32[1]{0}', space=sflag, size = 0x4, scoped, tag = 'scoped memory for space_warp.1']
    #allocation4 [shape = 's32[1]{0}', space=sflag, size = 0x4, scoped, tag = 'scoped memory for space_warp.1']
    #allocation5 [shape = 'u8[16384]{0}', space=vmem, size = 0x4000, scoped, tag = 'input window, operand 4, single buffered']
    #allocation6 [shape = 's32[1]{0}', space=sflag, size = 0x4, scoped, tag = 'scoped memory for space_warp.1']
    #allocation7 [shape = 'u8[131072]{0}', space=vmem, size = 0x20000, scoped, tag = 'output window, operand 0, single buffered']
    %10 = vsyncpa [#allocation3], 0
    %11 = vsyncpa [#allocation6], 0
    %12 = vsyncpa [#allocation4], 0
    // Predicated region
    $region2: #{space_warp.1} parent=1 // pred_check
      _
    $region3: #{space_warp.1} parent=1 // pred_check_branch
      %14 = sbr.rel (0) target = $region5
    $region4: #{space_warp.1} parent=1 // pred_region
      _
    $region5: #{space_warp.1} parent=1 // pred_fallthru
      _
    // Predicated region
    $region6: #{space_warp.1} parent=1 // pred_check
      _
    $region7: #{space_warp.1} parent=1 // pred_check_branch
      %16 = sbr.rel (0) target = $region9
    $region8: #{space_warp.1} parent=1 // pred_region
      _
    $region9: #{space_warp.1} parent=1 // pred_fallthru
      _
    // Predicated region
    $region10: #{space_warp.1} parent=1 // pred_check
      _
    $region11: #{space_warp.1} parent=1 // pred_check_branch
      %18 = sbr.rel (0) target = $region13
    $region12: #{space_warp.1} parent=1 // pred_region
      _
    $region13: #{space_warp.1} parent=1 // pred_fallthru
      _
    // Predicated region
    $region14: #{space_warp.1} parent=1 // pred_check
      _
    $region15: #{space_warp.1} parent=1 // pred_check_branch
      %20 = sbr.rel (0) target = $region17
    $region16: #{space_warp.1} parent=1 // pred_region
      %22 = vsyncadd [#allocation3], 0
      %s23 = sshll.u32 %s3, 4
      %s24 = int_to_ptr.hbm [resolvable:$true] %s23
      %s25 = sshll.u32 [#allocation2], 4
      %s26 = int_to_ptr.vmem [resolvable:$true] %s25
      %31 = dma.hbm_to_vmem [thread:$0]  %s24, 32768, %s26, [#allocation3], 2048, 2048, 128
    $region17: #{space_warp.1} parent=1 // pred_fallthru
      _
    // Predicated region
    $region18: #{space_warp.1} parent=1 // pred_check
      _
    $region19: #{space_warp.1} parent=1 // pred_check_branch
      %33 = sbr.rel (0) target = $region21
    $region20: #{space_warp.1} parent=1 // pred_region
      %35 = vsyncadd [#allocation6], 0
      %s37 = sshll.u32 %s4, 4
      %s38 = int_to_ptr.hbm [resolvable:$true] %s37
      %s39 = sshll.u32 [#allocation5], 4
      %s40 = int_to_ptr.vmem [resolvable:$true] %s39
      %42 = dma.hbm_to_vmem [thread:$0]  %s38, 512, %s40, [#allocation6]
    $region21: #{space_warp.1} parent=1 // pred_fallthru
      _
    // Predicated region
    $region22: #{space_warp.1} parent=1 // pred_check
      _
    $region23: #{space_warp.1} parent=1 // pred_check_branch
      %44 = sbr.rel (0) target = $region25
    $region24: #{space_warp.1} parent=1 // pred_region
      %46 = dma.done [#allocation3], 32768
    $region25: #{space_warp.1} parent=1 // pred_fallthru
      _
    // Predicated region
    $region26: #{space_warp.1} parent=1 // pred_check
      _
    $region27: #{space_warp.1} parent=1 // pred_check_branch
      %48 = sbr.rel (0) target = $region29
    $region28: #{space_warp.1} parent=1 // pred_region
      %50 = dma.done [#allocation6], 512
    $region29: #{space_warp.1} parent=1 // pred_fallthru
      _
    %v51 = vld [vmem:[%s0] sm:$0xff]
    %v52 = vld [vmem:[%s0 + $0x8] sm:$0xff]
    %v53 = vld [vmem:[%s1] sm:$0x3]
    %v54 = vld [vmem:[%s2] sm:$0x1]
    %56 = vset.pattern.permute.xlu0 0
    %57 = vperm.xlu0 %56, %v51
    %v58 = vpop.permute.xlu0 %57
    %61 = vset.pattern.permute.xlu0 0
    %62 = vperm.xlu0 %61, %v52
    %v63 = vpop.permute.xlu0 %62
    %v65 = vperm.slane %v53, 0
    %v66 = vmul.f32 %v58, %v65
    %v67 = vmul.f32 %v63, %v65
    %v69 = vperm.slane %v54, 0
    %v71 = vadd.f32 %v66, %v69
    %v72 = vadd.f32 %v67, %v69
    %73 = vset.pattern.permute.xlu0 1
    %74 = vperm.xlu0 %73, %v51
    %v75 = vpop.permute.xlu0 %74
    %77 = vset.pattern.permute.xlu0 1
    %78 = vperm.xlu0 %77, %v52
    %v79 = vpop.permute.xlu0 %78
    %v81 = vperm.slane %v53, 1
    %v82 = vmul.f32 %v75, %v81
    %v83 = vmul.f32 %v79, %v81
    %v84 = vadd.f32 %v71, %v82
    %v85 = vadd.f32 %v72, %v83
    %v86 = vmax.f32 %v84, 0.0
    %v87 = vmax.f32 %v85, 0.0
    %v88 = vpack.c.bf16 %v87, %v86
    %v89 = vld [vmem:[#allocation2] sm:$0xff]
    %v90 = vld [vmem:[#allocation2 + $0x8] sm:$0xff]
    %v91 = vld [vmem:[#allocation2 + $0x10] sm:$0xff]
    %v92 = vld [vmem:[#allocation2 + $0x18] sm:$0xff]
    %v93 = vld [vmem:[#allocation2 + $0x20] sm:$0xff]
    %v94 = vld [vmem:[#allocation2 + $0x28] sm:$0xff]
    %v95 = vld [vmem:[#allocation2 + $0x30] sm:$0xff]
    %v96 = vld [vmem:[#allocation2 + $0x38] sm:$0xff]
    %v97 = vld [vmem:[#allocation2 + $0x40] sm:$0xff]
    %v98 = vld [vmem:[#allocation2 + $0x48] sm:$0xff]
    %v99 = vld [vmem:[#allocation2 + $0x50] sm:$0xff]
    %v100 = vld [vmem:[#allocation2 + $0x58] sm:$0xff]
    %v101 = vld [vmem:[#allocation2 + $0x60] sm:$0xff]
    %v102 = vld [vmem:[#allocation2 + $0x68] sm:$0xff]
    %v103 = vld [vmem:[#allocation2 + $0x70] sm:$0xff]
    %v104 = vld [vmem:[#allocation2 + $0x78] sm:$0xff]
    %v105 = vld [vmem:[#allocation2 + $0x80] sm:$0xff]
    %v106 = vld [vmem:[#allocation2 + $0x88] sm:$0xff]
    %v107 = vld [vmem:[#allocation2 + $0x90] sm:$0xff]
    %v108 = vld [vmem:[#allocation2 + $0x98] sm:$0xff]
    %v109 = vld [vmem:[#allocation2 + $0xa0] sm:$0xff]
    %v110 = vld [vmem:[#allocation2 + $0xa8] sm:$0xff]
    %v111 = vld [vmem:[#allocation2 + $0xb0] sm:$0xff]
    %v112 = vld [vmem:[#allocation2 + $0xb8] sm:$0xff]
    %v113 = vld [vmem:[#allocation2 + $0xc0] sm:$0xff]
    %v114 = vld [vmem:[#allocation2 + $0xc8] sm:$0xff]
    %v115 = vld [vmem:[#allocation2 + $0xd0] sm:$0xff]
    %v116 = vld [vmem:[#allocation2 + $0xd8] sm:$0xff]
    %v117 = vld [vmem:[#allocation2 + $0xe0] sm:$0xff]
    %v118 = vld [vmem:[#allocation2 + $0xe8] sm:$0xff]
    %v119 = vld [vmem:[#allocation2 + $0xf0] sm:$0xff]
    %v120 = vld [vmem:[#allocation2 + $0xf8] sm:$0xff]
    %v121 = vld [vmem:[#allocation2 + $0x100] sm:$0xff]
    %v122 = vld [vmem:[#allocation2 + $0x108] sm:$0xff]
    %v123 = vld [vmem:[#allocation2 + $0x110] sm:$0xff]
    %v124 = vld [vmem:[#allocation2 + $0x118] sm:$0xff]
    %v125 = vld [vmem:[#allocation2 + $0x120] sm:$0xff]
    %v126 = vld [vmem:[#allocation2 + $0x128] sm:$0xff]
    %v127 = vld [vmem:[#allocation2 + $0x130] sm:$0xff]
    %v128 = vld [vmem:[#allocation2 + $0x138] sm:$0xff]
    %v129 = vld [vmem:[#allocation2 + $0x140] sm:$0xff]
    %v130 = vld [vmem:[#allocation2 + $0x148] sm:$0xff]
    %v131 = vld [vmem:[#allocation2 + $0x150] sm:$0xff]
    %v132 = vld [vmem:[#allocation2 + $0x158] sm:$0xff]
    %v133 = vld [vmem:[#allocation2 + $0x160] sm:$0xff]
    %v134 = vld [vmem:[#allocation2 + $0x168] sm:$0xff]
    %v135 = vld [vmem:[#allocation2 + $0x170] sm:$0xff]
    %v136 = vld [vmem:[#allocation2 + $0x178] sm:$0xff]
    %v137 = vld [vmem:[#allocation2 + $0x180] sm:$0xff]
    %v138 = vld [vmem:[#allocation2 + $0x188] sm:$0xff]
    %v139 = vld [vmem:[#allocation2 + $0x190] sm:$0xff]
    %v140 = vld [vmem:[#allocation2 + $0x198] sm:$0xff]
    %v141 = vld [vmem:[#allocation2 + $0x1a0] sm:$0xff]
    %v142 = vld [vmem:[#allocation2 + $0x1a8] sm:$0xff]
    %v143 = vld [vmem:[#allocation2 + $0x1b0] sm:$0xff]
    %v144 = vld [vmem:[#allocation2 + $0x1b8] sm:$0xff]
    %v145 = vld [vmem:[#allocation2 + $0x1c0] sm:$0xff]
    %v146 = vld [vmem:[#allocation2 + $0x1c8] sm:$0xff]
    %v147 = vld [vmem:[#allocation2 + $0x1d0] sm:$0xff]
    %v148 = vld [vmem:[#allocation2 + $0x1d8] sm:$0xff]
    %v149 = vld [vmem:[#allocation2 + $0x1e0] sm:$0xff]
    %v150 = vld [vmem:[#allocation2 + $0x1e8] sm:$0xff]
    %v151 = vld [vmem:[#allocation2 + $0x1f0] sm:$0xff]
    %v152 = vld [vmem:[#allocation2 + $0x1f8] sm:$0xff]
    %v153 = vld [vmem:[#allocation2 + $0x200] sm:$0xff]
    %v154 = vld [vmem:[#allocation2 + $0x208] sm:$0xff]
    %v155 = vld [vmem:[#allocation2 + $0x210] sm:$0xff]
    %v156 = vld [vmem:[#allocation2 + $0x218] sm:$0xff]
    %v157 = vld [vmem:[#allocation2 + $0x220] sm:$0xff]
    %v158 = vld [vmem:[#allocation2 + $0x228] sm:$0xff]
    %v159 = vld [vmem:[#allocation2 + $0x230] sm:$0xff]
    %v160 = vld [vmem:[#allocation2 + $0x238] sm:$0xff]
    %v161 = vld [vmem:[#allocation2 + $0x240] sm:$0xff]
    %v162 = vld [vmem:[#allocation2 + $0x248] sm:$0xff]
    %v163 = vld [vmem:[#allocation2 + $0x250] sm:$0xff]
    %v164 = vld [vmem:[#allocation2 + $0x258] sm:$0xff]
    %v165 = vld [vmem:[#allocation2 + $0x260] sm:$0xff]
    %v166 = vld [vmem:[#allocation2 + $0x268] sm:$0xff]
    %v167 = vld [vmem:[#allocation2 + $0x270] sm:$0xff]
    %v168 = vld [vmem:[#allocation2 + $0x278] sm:$0xff]
    %v169 = vld [vmem:[#allocation2 + $0x280] sm:$0xff]
    %v170 = vld [vmem:[#allocation2 + $0x288] sm:$0xff]
    %v171 = vld [vmem:[#allocation2 + $0x290] sm:$0xff]
    %v172 = vld [vmem:[#allocation2 + $0x298] sm:$0xff]
    %v173 = vld [vmem:[#allocation2 + $0x2a0] sm:$0xff]
    %v174 = vld [vmem:[#allocation2 + $0x2a8] sm:$0xff]
    %v175 = vld [vmem:[#allocation2 + $0x2b0] sm:$0xff]
    %v176 = vld [vmem:[#allocation2 + $0x2b8] sm:$0xff]
    %v177 = vld [vmem:[#allocation2 + $0x2c0] sm:$0xff]
    %v178 = vld [vmem:[#allocation2 + $0x2c8] sm:$0xff]
    %v179 = vld [vmem:[#allocation2 + $0x2d0] sm:$0xff]
    %v180 = vld [vmem:[#allocation2 + $0x2d8] sm:$0xff]
    %v181 = vld [vmem:[#allocation2 + $0x2e0] sm:$0xff]
    %v182 = vld [vmem:[#allocation2 + $0x2e8] sm:$0xff]
    %v183 = vld [vmem:[#allocation2 + $0x2f0] sm:$0xff]
    %v184 = vld [vmem:[#allocation2 + $0x2f8] sm:$0xff]
    %v185 = vld [vmem:[#allocation2 + $0x300] sm:$0xff]
    %v186 = vld [vmem:[#allocation2 + $0x308] sm:$0xff]
    %v187 = vld [vmem:[#allocation2 + $0x310] sm:$0xff]
    %v188 = vld [vmem:[#allocation2 + $0x318] sm:$0xff]
    %v189 = vld [vmem:[#allocation2 + $0x320] sm:$0xff]
    %v190 = vld [vmem:[#allocation2 + $0x328] sm:$0xff]
    %v191 = vld [vmem:[#allocation2 + $0x330] sm:$0xff]
    %v192 = vld [vmem:[#allocation2 + $0x338] sm:$0xff]
    %v193 = vld [vmem:[#allocation2 + $0x340] sm:$0xff]
    %v194 = vld [vmem:[#allocation2 + $0x348] sm:$0xff]
    %v195 = vld [vmem:[#allocation2 + $0x350] sm:$0xff]
    %v196 = vld [vmem:[#allocation2 + $0x358] sm:$0xff]
    %v197 = vld [vmem:[#allocation2 + $0x360] sm:$0xff]
    %v198 = vld [vmem:[#allocation2 + $0x368] sm:$0xff]
    %v199 = vld [vmem:[#allocation2 + $0x370] sm:$0xff]
    %v200 = vld [vmem:[#allocation2 + $0x378] sm:$0xff]
    %v201 = vld [vmem:[#allocation2 + $0x380] sm:$0xff]
    %v202 = vld [vmem:[#allocation2 + $0x388] sm:$0xff]
    %v203 = vld [vmem:[#allocation2 + $0x390] sm:$0xff]
    %v204 = vld [vmem:[#allocation2 + $0x398] sm:$0xff]
    %v205 = vld [vmem:[#allocation2 + $0x3a0] sm:$0xff]
    %v206 = vld [vmem:[#allocation2 + $0x3a8] sm:$0xff]
    %v207 = vld [vmem:[#allocation2 + $0x3b0] sm:$0xff]
    %v208 = vld [vmem:[#allocation2 + $0x3b8] sm:$0xff]
    %v209 = vld [vmem:[#allocation2 + $0x3c0] sm:$0xff]
    %v210 = vld [vmem:[#allocation2 + $0x3c8] sm:$0xff]
    %v211 = vld [vmem:[#allocation2 + $0x3d0] sm:$0xff]
    %v212 = vld [vmem:[#allocation2 + $0x3d8] sm:$0xff]
    %v213 = vld [vmem:[#allocation2 + $0x3e0] sm:$0xff]
    %v214 = vld [vmem:[#allocation2 + $0x3e8] sm:$0xff]
    %v215 = vld [vmem:[#allocation2 + $0x3f0] sm:$0xff]
    %v216 = vld [vmem:[#allocation2 + $0x3f8] sm:$0xff]
    %v217 = vld [vmem:[#allocation2 + $0x400] sm:$0xff]
    %v218 = vld [vmem:[#allocation2 + $0x408] sm:$0xff]
    %v219 = vld [vmem:[#allocation2 + $0x410] sm:$0xff]
    %v220 = vld [vmem:[#allocation2 + $0x418] sm:$0xff]
    %v221 = vld [vmem:[#allocation2 + $0x420] sm:$0xff]
    %v222 = vld [vmem:[#allocation2 + $0x428] sm:$0xff]
    %v223 = vld [vmem:[#allocation2 + $0x430] sm:$0xff]
    %v224 = vld [vmem:[#allocation2 + $0x438] sm:$0xff]
    %v225 = vld [vmem:[#allocation2 + $0x440] sm:$0xff]
    %v226 = vld [vmem:[#allocation2 + $0x448] sm:$0xff]
    %v227 = vld [vmem:[#allocation2 + $0x450] sm:$0xff]
    %v228 = vld [vmem:[#allocation2 + $0x458] sm:$0xff]
    %v229 = vld [vmem:[#allocation2 + $0x460] sm:$0xff]
    %v230 = vld [vmem:[#allocation2 + $0x468] sm:$0xff]
    %v231 = vld [vmem:[#allocation2 + $0x470] sm:$0xff]
    %v232 = vld [vmem:[#allocation2 + $0x478] sm:$0xff]
    %v233 = vld [vmem:[#allocation2 + $0x480] sm:$0xff]
    %v234 = vld [vmem:[#allocation2 + $0x488] sm:$0xff]
    %v235 = vld [vmem:[#allocation2 + $0x490] sm:$0xff]
    %v236 = vld [vmem:[#allocation2 + $0x498] sm:$0xff]
    %v237 = vld [vmem:[#allocation2 + $0x4a0] sm:$0xff]
    %v238 = vld [vmem:[#allocation2 + $0x4a8] sm:$0xff]
    %v239 = vld [vmem:[#allocation2 + $0x4b0] sm:$0xff]
    %v240 = vld [vmem:[#allocation2 + $0x4b8] sm:$0xff]
    %v241 = vld [vmem:[#allocation2 + $0x4c0] sm:$0xff]
    %v242 = vld [vmem:[#allocation2 + $0x4c8] sm:$0xff]
    %v243 = vld [vmem:[#allocation2 + $0x4d0] sm:$0xff]
    %v244 = vld [vmem:[#allocation2 + $0x4d8] sm:$0xff]
    %v245 = vld [vmem:[#allocation2 + $0x4e0] sm:$0xff]
    %v246 = vld [vmem:[#allocation2 + $0x4e8] sm:$0xff]
    %v247 = vld [vmem:[#allocation2 + $0x4f0] sm:$0xff]
    %v248 = vld [vmem:[#allocation2 + $0x4f8] sm:$0xff]
    %v249 = vld [vmem:[#allocation2 + $0x500] sm:$0xff]
    %v250 = vld [vmem:[#allocation2 + $0x508] sm:$0xff]
    %v251 = vld [vmem:[#allocation2 + $0x510] sm:$0xff]
    %v252 = vld [vmem:[#allocation2 + $0x518] sm:$0xff]
    %v253 = vld [vmem:[#allocation2 + $0x520] sm:$0xff]
    %v254 = vld [vmem:[#allocation2 + $0x528] sm:$0xff]
    %v255 = vld [vmem:[#allocation2 + $0x530] sm:$0xff]
    %v256 = vld [vmem:[#allocation2 + $0x538] sm:$0xff]
    %v257 = vld [vmem:[#allocation2 + $0x540] sm:$0xff]
    %v258 = vld [vmem:[#allocation2 + $0x548] sm:$0xff]
    %v259 = vld [vmem:[#allocation2 + $0x550] sm:$0xff]
    %v260 = vld [vmem:[#allocation2 + $0x558] sm:$0xff]
    %v261 = vld [vmem:[#allocation2 + $0x560] sm:$0xff]
    %v262 = vld [vmem:[#allocation2 + $0x568] sm:$0xff]
    %v263 = vld [vmem:[#allocation2 + $0x570] sm:$0xff]
    %v264 = vld [vmem:[#allocation2 + $0x578] sm:$0xff]
    %v265 = vld [vmem:[#allocation2 + $0x580] sm:$0xff]
    %v266 = vld [vmem:[#allocation2 + $0x588] sm:$0xff]
    %v267 = vld [vmem:[#allocation2 + $0x590] sm:$0xff]
    %v268 = vld [vmem:[#allocation2 + $0x598] sm:$0xff]
    %v269 = vld [vmem:[#allocation2 + $0x5a0] sm:$0xff]
    %v270 = vld [vmem:[#allocation2 + $0x5a8] sm:$0xff]
    %v271 = vld [vmem:[#allocation2 + $0x5b0] sm:$0xff]
    %v272 = vld [vmem:[#allocation2 + $0x5b8] sm:$0xff]
    %v273 = vld [vmem:[#allocation2 + $0x5c0] sm:$0xff]
    %v274 = vld [vmem:[#allocation2 + $0x5c8] sm:$0xff]
    %v275 = vld [vmem:[#allocation2 + $0x5d0] sm:$0xff]
    %v276 = vld [vmem:[#allocation2 + $0x5d8] sm:$0xff]
    %v277 = vld [vmem:[#allocation2 + $0x5e0] sm:$0xff]
    %v278 = vld [vmem:[#allocation2 + $0x5e8] sm:$0xff]
    %v279 = vld [vmem:[#allocation2 + $0x5f0] sm:$0xff]
    %v280 = vld [vmem:[#allocation2 + $0x5f8] sm:$0xff]
    %v281 = vld [vmem:[#allocation2 + $0x600] sm:$0xff]
    %v282 = vld [vmem:[#allocation2 + $0x608] sm:$0xff]
    %v283 = vld [vmem:[#allocation2 + $0x610] sm:$0xff]
    %v284 = vld [vmem:[#allocation2 + $0x618] sm:$0xff]
    %v285 = vld [vmem:[#allocation2 + $0x620] sm:$0xff]
    %v286 = vld [vmem:[#allocation2 + $0x628] sm:$0xff]
    %v287 = vld [vmem:[#allocation2 + $0x630] sm:$0xff]
    %v288 = vld [vmem:[#allocation2 + $0x638] sm:$0xff]
    %v289 = vld [vmem:[#allocation2 + $0x640] sm:$0xff]
    %v290 = vld [vmem:[#allocation2 + $0x648] sm:$0xff]
    %v291 = vld [vmem:[#allocation2 + $0x650] sm:$0xff]
    %v292 = vld [vmem:[#allocation2 + $0x658] sm:$0xff]
    %v293 = vld [vmem:[#allocation2 + $0x660] sm:$0xff]
    %v294 = vld [vmem:[#allocation2 + $0x668] sm:$0xff]
    %v295 = vld [vmem:[#allocation2 + $0x670] sm:$0xff]
    %v296 = vld [vmem:[#allocation2 + $0x678] sm:$0xff]
    %v297 = vld [vmem:[#allocation2 + $0x680] sm:$0xff]
    %v298 = vld [vmem:[#allocation2 + $0x688] sm:$0xff]
    %v299 = vld [vmem:[#allocation2 + $0x690] sm:$0xff]
    %v300 = vld [vmem:[#allocation2 + $0x698] sm:$0xff]
    %v301 = vld [vmem:[#allocation2 + $0x6a0] sm:$0xff]
    %v302 = vld [vmem:[#allocation2 + $0x6a8] sm:$0xff]
    %v303 = vld [vmem:[#allocation2 + $0x6b0] sm:$0xff]
    %v304 = vld [vmem:[#allocation2 + $0x6b8] sm:$0xff]
    %v305 = vld [vmem:[#allocation2 + $0x6c0] sm:$0xff]
    %v306 = vld [vmem:[#allocation2 + $0x6c8] sm:$0xff]
    %v307 = vld [vmem:[#allocation2 + $0x6d0] sm:$0xff]
    %v308 = vld [vmem:[#allocation2 + $0x6d8] sm:$0xff]
    %v309 = vld [vmem:[#allocation2 + $0x6e0] sm:$0xff]
    %v310 = vld [vmem:[#allocation2 + $0x6e8] sm:$0xff]
    %v311 = vld [vmem:[#allocation2 + $0x6f0] sm:$0xff]
    %v312 = vld [vmem:[#allocation2 + $0x6f8] sm:$0xff]
    %v313 = vld [vmem:[#allocation2 + $0x700] sm:$0xff]
    %v314 = vld [vmem:[#allocation2 + $0x708] sm:$0xff]
    %v315 = vld [vmem:[#allocation2 + $0x710] sm:$0xff]
    %v316 = vld [vmem:[#allocation2 + $0x718] sm:$0xff]
    %v317 = vld [vmem:[#allocation2 + $0x720] sm:$0xff]
    %v318 = vld [vmem:[#allocation2 + $0x728] sm:$0xff]
    %v319 = vld [vmem:[#allocation2 + $0x730] sm:$0xff]
    %v320 = vld [vmem:[#allocation2 + $0x738] sm:$0xff]
    %v321 = vld [vmem:[#allocation2 + $0x740] sm:$0xff]
    %v322 = vld [vmem:[#allocation2 + $0x748] sm:$0xff]
    %v323 = vld [vmem:[#allocation2 + $0x750] sm:$0xff]
    %v324 = vld [vmem:[#allocation2 + $0x758] sm:$0xff]
    %v325 = vld [vmem:[#allocation2 + $0x760] sm:$0xff]
    %v326 = vld [vmem:[#allocation2 + $0x768] sm:$0xff]
    %v327 = vld [vmem:[#allocation2 + $0x770] sm:$0xff]
    %v328 = vld [vmem:[#allocation2 + $0x778] sm:$0xff]
    %v329 = vld [vmem:[#allocation2 + $0x780] sm:$0xff]
    %v330 = vld [vmem:[#allocation2 + $0x788] sm:$0xff]
    %v331 = vld [vmem:[#allocation2 + $0x790] sm:$0xff]
    %v332 = vld [vmem:[#allocation2 + $0x798] sm:$0xff]
    %v333 = vld [vmem:[#allocation2 + $0x7a0] sm:$0xff]
    %v334 = vld [vmem:[#allocation2 + $0x7a8] sm:$0xff]
    %v335 = vld [vmem:[#allocation2 + $0x7b0] sm:$0xff]
    %v336 = vld [vmem:[#allocation2 + $0x7b8] sm:$0xff]
    %v337 = vld [vmem:[#allocation2 + $0x7c0] sm:$0xff]
    %v338 = vld [vmem:[#allocation2 + $0x7c8] sm:$0xff]
    %v339 = vld [vmem:[#allocation2 + $0x7d0] sm:$0xff]
    %v340 = vld [vmem:[#allocation2 + $0x7d8] sm:$0xff]
    %v341 = vld [vmem:[#allocation2 + $0x7e0] sm:$0xff]
    %v342 = vld [vmem:[#allocation2 + $0x7e8] sm:$0xff]
    %v343 = vld [vmem:[#allocation2 + $0x7f0] sm:$0xff]
    %v344 = vld [vmem:[#allocation2 + $0x7f8] sm:$0xff]
    %v601 = vunpack.c.l.b16 %v89
    %v602 = vunpack.c.h.b16 %v89
    %v603 = vunpack.c.l.b16 %v90
    %v604 = vunpack.c.h.b16 %v90
    %v605 = vunpack.c.l.b16 %v91
    %v606 = vunpack.c.h.b16 %v91
    %v607 = vunpack.c.l.b16 %v92
    %v608 = vunpack.c.h.b16 %v92
    %v609 = vunpack.c.l.b16 %v93
    %v610 = vunpack.c.h.b16 %v93
    %v611 = vunpack.c.l.b16 %v94
    %v612 = vunpack.c.h.b16 %v94
    %v613 = vunpack.c.l.b16 %v95
    %v614 = vunpack.c.h.b16 %v95
    %v615 = vunpack.c.l.b16 %v96
    %v616 = vunpack.c.h.b16 %v96
    %v617 = vunpack.c.l.b16 %v97
    %v618 = vunpack.c.h.b16 %v97
    %v619 = vunpack.c.l.b16 %v98
    %v620 = vunpack.c.h.b16 %v98
    %v621 = vunpack.c.l.b16 %v99
    %v622 = vunpack.c.h.b16 %v99
    %v623 = vunpack.c.l.b16 %v100
    %v624 = vunpack.c.h.b16 %v100
    %v625 = vunpack.c.l.b16 %v101
    %v626 = vunpack.c.h.b16 %v101
    %v627 = vunpack.c.l.b16 %v102
    %v628 = vunpack.c.h.b16 %v102
    %v629 = vunpack.c.l.b16 %v103
    %v630 = vunpack.c.h.b16 %v103
    %v631 = vunpack.c.l.b16 %v104
    %v632 = vunpack.c.h.b16 %v104
    %v633 = vunpack.c.l.b16 %v105
    %v634 = vunpack.c.h.b16 %v105
    %v635 = vunpack.c.l.b16 %v106
    %v636 = vunpack.c.h.b16 %v106
    %v637 = vunpack.c.l.b16 %v107
    %v638 = vunpack.c.h.b16 %v107
    %v639 = vunpack.c.l.b16 %v108
    %v640 = vunpack.c.h.b16 %v108
    %v641 = vunpack.c.l.b16 %v109
    %v642 = vunpack.c.h.b16 %v109
    %v643 = vunpack.c.l.b16 %v110
    %v644 = vunpack.c.h.b16 %v110
    %v645 = vunpack.c.l.b16 %v111
    %v646 = vunpack.c.h.b16 %v111
    %v647 = vunpack.c.l.b16 %v112
    %v648 = vunpack.c.h.b16 %v112
    %v649 = vunpack.c.l.b16 %v113
    %v650 = vunpack.c.h.b16 %v113
    %v651 = vunpack.c.l.b16 %v114
    %v652 = vunpack.c.h.b16 %v114
    %v653 = vunpack.c.l.b16 %v115
    %v654 = vunpack.c.h.b16 %v115
    %v655 = vunpack.c.l.b16 %v116
    %v656 = vunpack.c.h.b16 %v116
    %v657 = vunpack.c.l.b16 %v117
    %v658 = vunpack.c.h.b16 %v117
    %v659 = vunpack.c.l.b16 %v118
    %v660 = vunpack.c.h.b16 %v118
    %v661 = vunpack.c.l.b16 %v119
    %v662 = vunpack.c.h.b16 %v119
    %v663 = vunpack.c.l.b16 %v120
    %v664 = vunpack.c.h.b16 %v120
    %v665 = vunpack.c.l.b16 %v121
    %v666 = vunpack.c.h.b16 %v121
    %v667 = vunpack.c.l.b16 %v122
    %v668 = vunpack.c.h.b16 %v122
    %v669 = vunpack.c.l.b16 %v123
    %v670 = vunpack.c.h.b16 %v123
    %v671 = vunpack.c.l.b16 %v124
    %v672 = vunpack.c.h.b16 %v124
    %v673 = vunpack.c.l.b16 %v125
    %v674 = vunpack.c.h.b16 %v125
    %v675 = vunpack.c.l.b16 %v126
    %v676 = vunpack.c.h.b16 %v126
    %v677 = vunpack.c.l.b16 %v127
    %v678 = vunpack.c.h.b16 %v127
    %v679 = vunpack.c.l.b16 %v128
    %v680 = vunpack.c.h.b16 %v128
    %v681 = vunpack.c.l.b16 %v129
    %v682 = vunpack.c.h.b16 %v129
    %v683 = vunpack.c.l.b16 %v130
    %v684 = vunpack.c.h.b16 %v130
    %v685 = vunpack.c.l.b16 %v131
    %v686 = vunpack.c.h.b16 %v131
    %v687 = vunpack.c.l.b16 %v132
    %v688 = vunpack.c.h.b16 %v132
    %v689 = vunpack.c.l.b16 %v133
    %v690 = vunpack.c.h.b16 %v133
    %v691 = vunpack.c.l.b16 %v134
    %v692 = vunpack.c.h.b16 %v134
    %v693 = vunpack.c.l.b16 %v135
    %v694 = vunpack.c.h.b16 %v135
    %v695 = vunpack.c.l.b16 %v136
    %v696 = vunpack.c.h.b16 %v136
    %v697 = vunpack.c.l.b16 %v137
    %v698 = vunpack.c.h.b16 %v137
    %v699 = vunpack.c.l.b16 %v138
    %v700 = vunpack.c.h.b16 %v138
    %v701 = vunpack.c.l.b16 %v139
    %v702 = vunpack.c.h.b16 %v139
    %v703 = vunpack.c.l.b16 %v140
    %v704 = vunpack.c.h.b16 %v140
    %v705 = vunpack.c.l.b16 %v141
    %v706 = vunpack.c.h.b16 %v141
    %v707 = vunpack.c.l.b16 %v142
    %v708 = vunpack.c.h.b16 %v142
    %v709 = vunpack.c.l.b16 %v143
    %v710 = vunpack.c.h.b16 %v143
    %v711 = vunpack.c.l.b16 %v144
    %v712 = vunpack.c.h.b16 %v144
    %v713 = vunpack.c.l.b16 %v145
    %v714 = vunpack.c.h.b16 %v145
    %v715 = vunpack.c.l.b16 %v146
    %v716 = vunpack.c.h.b16 %v146
    %v717 = vunpack.c.l.b16 %v147
    %v718 = vunpack.c.h.b16 %v147
    %v719 = vunpack.c.l.b16 %v148
    %v720 = vunpack.c.h.b16 %v148
    %v721 = vunpack.c.l.b16 %v149
    %v722 = vunpack.c.h.b16 %v149
    %v723 = vunpack.c.l.b16 %v150
    %v724 = vunpack.c.h.b16 %v150
    %v725 = vunpack.c.l.b16 %v151
    %v726 = vunpack.c.h.b16 %v151
    %v727 = vunpack.c.l.b16 %v152
    %v728 = vunpack.c.h.b16 %v152
    %v729 = vunpack.c.l.b16 %v153
    %v730 = vunpack.c.h.b16 %v153
    %v731 = vunpack.c.l.b16 %v154
    %v732 = vunpack.c.h.b16 %v154
    %v733 = vunpack.c.l.b16 %v155
    %v734 = vunpack.c.h.b16 %v155
    %v735 = vunpack.c.l.b16 %v156
    %v736 = vunpack.c.h.b16 %v156
    %v737 = vunpack.c.l.b16 %v157
    %v738 = vunpack.c.h.b16 %v157
    %v739 = vunpack.c.l.b16 %v158
    %v740 = vunpack.c.h.b16 %v158
    %v741 = vunpack.c.l.b16 %v159
    %v742 = vunpack.c.h.b16 %v159
    %v743 = vunpack.c.l.b16 %v160
    %v744 = vunpack.c.h.b16 %v160
    %v745 = vunpack.c.l.b16 %v161
    %v746 = vunpack.c.h.b16 %v161
    %v747 = vunpack.c.l.b16 %v162
    %v748 = vunpack.c.h.b16 %v162
    %v749 = vunpack.c.l.b16 %v163
    %v750 = vunpack.c.h.b16 %v163
    %v751 = vunpack.c.l.b16 %v164
    %v752 = vunpack.c.h.b16 %v164
    %v753 = vunpack.c.l.b16 %v165
    %v754 = vunpack.c.h.b16 %v165
    %v755 = vunpack.c.l.b16 %v166
    %v756 = vunpack.c.h.b16 %v166
    %v757 = vunpack.c.l.b16 %v167
    %v758 = vunpack.c.h.b16 %v167
    %v759 = vunpack.c.l.b16 %v168
    %v760 = vunpack.c.h.b16 %v168
    %v761 = vunpack.c.l.b16 %v169
    %v762 = vunpack.c.h.b16 %v169
    %v763 = vunpack.c.l.b16 %v170
    %v764 = vunpack.c.h.b16 %v170
    %v765 = vunpack.c.l.b16 %v171
    %v766 = vunpack.c.h.b16 %v171
    %v767 = vunpack.c.l.b16 %v172
    %v768 = vunpack.c.h.b16 %v172
    %v769 = vunpack.c.l.b16 %v173
    %v770 = vunpack.c.h.b16 %v173
    %v771 = vunpack.c.l.b16 %v174
    %v772 = vunpack.c.h.b16 %v174
    %v773 = vunpack.c.l.b16 %v175
    %v774 = vunpack.c.h.b16 %v175
    %v775 = vunpack.c.l.b16 %v176
    %v776 = vunpack.c.h.b16 %v176
    %v777 = vunpack.c.l.b16 %v177
    %v778 = vunpack.c.h.b16 %v177
    %v779 = vunpack.c.l.b16 %v178
    %v780 = vunpack.c.h.b16 %v178
    %v781 = vunpack.c.l.b16 %v179
    %v782 = vunpack.c.h.b16 %v179
    %v783 = vunpack.c.l.b16 %v180
    %v784 = vunpack.c.h.b16 %v180
    %v785 = vunpack.c.l.b16 %v181
    %v786 = vunpack.c.h.b16 %v181
    %v787 = vunpack.c.l.b16 %v182
    %v788 = vunpack.c.h.b16 %v182
    %v789 = vunpack.c.l.b16 %v183
    %v790 = vunpack.c.h.b16 %v183
    %v791 = vunpack.c.l.b16 %v184
    %v792 = vunpack.c.h.b16 %v184
    %v793 = vunpack.c.l.b16 %v185
    %v794 = vunpack.c.h.b16 %v185
    %v795 = vunpack.c.l.b16 %v186
    %v796 = vunpack.c.h.b16 %v186
    %v797 = vunpack.c.l.b16 %v187
    %v798 = vunpack.c.h.b16 %v187
    %v799 = vunpack.c.l.b16 %v188
    %v800 = vunpack.c.h.b16 %v188
    %v801 = vunpack.c.l.b16 %v189
    %v802 = vunpack.c.h.b16 %v189
    %v803 = vunpack.c.l.b16 %v190
    %v804 = vunpack.c.h.b16 %v190
    %v805 = vunpack.c.l.b16 %v191
    %v806 = vunpack.c.h.b16 %v191
    %v807 = vunpack.c.l.b16 %v192
    %v808 = vunpack.c.h.b16 %v192
    %v809 = vunpack.c.l.b16 %v193
    %v810 = vunpack.c.h.b16 %v193
    %v811 = vunpack.c.l.b16 %v194
    %v812 = vunpack.c.h.b16 %v194
    %v813 = vunpack.c.l.b16 %v195
    %v814 = vunpack.c.h.b16 %v195
    %v815 = vunpack.c.l.b16 %v196
    %v816 = vunpack.c.h.b16 %v196
    %v817 = vunpack.c.l.b16 %v197
    %v818 = vunpack.c.h.b16 %v197
    %v819 = vunpack.c.l.b16 %v198
    %v820 = vunpack.c.h.b16 %v198
    %v821 = vunpack.c.l.b16 %v199
    %v822 = vunpack.c.h.b16 %v199
    %v823 = vunpack.c.l.b16 %v200
    %v824 = vunpack.c.h.b16 %v200
    %v825 = vunpack.c.l.b16 %v201
    %v826 = vunpack.c.h.b16 %v201
    %v827 = vunpack.c.l.b16 %v202
    %v828 = vunpack.c.h.b16 %v202
    %v829 = vunpack.c.l.b16 %v203
    %v830 = vunpack.c.h.b16 %v203
    %v831 = vunpack.c.l.b16 %v204
    %v832 = vunpack.c.h.b16 %v204
    %v833 = vunpack.c.l.b16 %v205
    %v834 = vunpack.c.h.b16 %v205
    %v835 = vunpack.c.l.b16 %v206
    %v836 = vunpack.c.h.b16 %v206
    %v837 = vunpack.c.l.b16 %v207
    %v838 = vunpack.c.h.b16 %v207
    %v839 = vunpack.c.l.b16 %v208
    %v840 = vunpack.c.h.b16 %v208
    %v841 = vunpack.c.l.b16 %v209
    %v842 = vunpack.c.h.b16 %v209
    %v843 = vunpack.c.l.b16 %v210
    %v844 = vunpack.c.h.b16 %v210
    %v845 = vunpack.c.l.b16 %v211
    %v846 = vunpack.c.h.b16 %v211
    %v847 = vunpack.c.l.b16 %v212
    %v848 = vunpack.c.h.b16 %v212
    %v849 = vunpack.c.l.b16 %v213
    %v850 = vunpack.c.h.b16 %v213
    %v851 = vunpack.c.l.b16 %v214
    %v852 = vunpack.c.h.b16 %v214
    %v853 = vunpack.c.l.b16 %v215
    %v854 = vunpack.c.h.b16 %v215
    %v855 = vunpack.c.l.b16 %v216
    %v856 = vunpack.c.h.b16 %v216
    %v857 = vunpack.c.l.b16 %v217
    %v858 = vunpack.c.h.b16 %v217
    %v859 = vunpack.c.l.b16 %v218
    %v860 = vunpack.c.h.b16 %v218
    %v861 = vunpack.c.l.b16 %v219
    %v862 = vunpack.c.h.b16 %v219
    %v863 = vunpack.c.l.b16 %v220
    %v864 = vunpack.c.h.b16 %v220
    %v865 = vunpack.c.l.b16 %v221
    %v866 = vunpack.c.h.b16 %v221
    %v867 = vunpack.c.l.b16 %v222
    %v868 = vunpack.c.h.b16 %v222
    %v869 = vunpack.c.l.b16 %v223
    %v870 = vunpack.c.h.b16 %v223
    %v871 = vunpack.c.l.b16 %v224
    %v872 = vunpack.c.h.b16 %v224
    %v873 = vunpack.c.l.b16 %v225
    %v874 = vunpack.c.h.b16 %v225
    %v875 = vunpack.c.l.b16 %v226
    %v876 = vunpack.c.h.b16 %v226
    %v877 = vunpack.c.l.b16 %v227
    %v878 = vunpack.c.h.b16 %v227
    %v879 = vunpack.c.l.b16 %v228
    %v880 = vunpack.c.h.b16 %v228
    %v881 = vunpack.c.l.b16 %v229
    %v882 = vunpack.c.h.b16 %v229
    %v883 = vunpack.c.l.b16 %v230
    %v884 = vunpack.c.h.b16 %v230
    %v885 = vunpack.c.l.b16 %v231
    %v886 = vunpack.c.h.b16 %v231
    %v887 = vunpack.c.l.b16 %v232
    %v888 = vunpack.c.h.b16 %v232
    %v889 = vunpack.c.l.b16 %v233
    %v890 = vunpack.c.h.b16 %v233
    %v891 = vunpack.c.l.b16 %v234
    %v892 = vunpack.c.h.b16 %v234
    %v893 = vunpack.c.l.b16 %v235
    %v894 = vunpack.c.h.b16 %v235
    %v895 = vunpack.c.l.b16 %v236
    %v896 = vunpack.c.h.b16 %v236
    %v897 = vunpack.c.l.b16 %v237
    %v898 = vunpack.c.h.b16 %v237
    %v899 = vunpack.c.l.b16 %v238
    %v900 = vunpack.c.h.b16 %v238
    %v901 = vunpack.c.l.b16 %v239
    %v902 = vunpack.c.h.b16 %v239
    %v903 = vunpack.c.l.b16 %v240
    %v904 = vunpack.c.h.b16 %v240
    %v905 = vunpack.c.l.b16 %v241
    %v906 = vunpack.c.h.b16 %v241
    %v907 = vunpack.c.l.b16 %v242
    %v908 = vunpack.c.h.b16 %v242
    %v909 = vunpack.c.l.b16 %v243
    %v910 = vunpack.c.h.b16 %v243
    %v911 = vunpack.c.l.b16 %v244
    %v912 = vunpack.c.h.b16 %v244
    %v913 = vunpack.c.l.b16 %v245
    %v914 = vunpack.c.h.b16 %v245
    %v915 = vunpack.c.l.b16 %v246
    %v916 = vunpack.c.h.b16 %v246
    %v917 = vunpack.c.l.b16 %v247
    %v918 = vunpack.c.h.b16 %v247
    %v919 = vunpack.c.l.b16 %v248
    %v920 = vunpack.c.h.b16 %v248
    %v921 = vunpack.c.l.b16 %v249
    %v922 = vunpack.c.h.b16 %v249
    %v923 = vunpack.c.l.b16 %v250
    %v924 = vunpack.c.h.b16 %v250
    %v925 = vunpack.c.l.b16 %v251
    %v926 = vunpack.c.h.b16 %v251
    %v927 = vunpack.c.l.b16 %v252
    %v928 = vunpack.c.h.b16 %v252
    %v929 = vunpack.c.l.b16 %v253
    %v930 = vunpack.c.h.b16 %v253
    %v931 = vunpack.c.l.b16 %v254
    %v932 = vunpack.c.h.b16 %v254
    %v933 = vunpack.c.l.b16 %v255
    %v934 = vunpack.c.h.b16 %v255
    %v935 = vunpack.c.l.b16 %v256
    %v936 = vunpack.c.h.b16 %v256
    %v937 = vunpack.c.l.b16 %v257
    %v938 = vunpack.c.h.b16 %v257
    %v939 = vunpack.c.l.b16 %v258
    %v940 = vunpack.c.h.b16 %v258
    %v941 = vunpack.c.l.b16 %v259
    %v942 = vunpack.c.h.b16 %v259
    %v943 = vunpack.c.l.b16 %v260
    %v944 = vunpack.c.h.b16 %v260
    %v945 = vunpack.c.l.b16 %v261
    %v946 = vunpack.c.h.b16 %v261
    %v947 = vunpack.c.l.b16 %v262
    %v948 = vunpack.c.h.b16 %v262
    %v949 = vunpack.c.l.b16 %v263
    %v950 = vunpack.c.h.b16 %v263
    %v951 = vunpack.c.l.b16 %v264
    %v952 = vunpack.c.h.b16 %v264
    %v953 = vunpack.c.l.b16 %v265
    %v954 = vunpack.c.h.b16 %v265
    %v955 = vunpack.c.l.b16 %v266
    %v956 = vunpack.c.h.b16 %v266
    %v957 = vunpack.c.l.b16 %v267
    %v958 = vunpack.c.h.b16 %v267
    %v959 = vunpack.c.l.b16 %v268
    %v960 = vunpack.c.h.b16 %v268
    %v961 = vunpack.c.l.b16 %v269
    %v962 = vunpack.c.h.b16 %v269
    %v963 = vunpack.c.l.b16 %v270
    %v964 = vunpack.c.h.b16 %v270
    %v965 = vunpack.c.l.b16 %v271
    %v966 = vunpack.c.h.b16 %v271
    %v967 = vunpack.c.l.b16 %v272
    %v968 = vunpack.c.h.b16 %v272
    %v969 = vunpack.c.l.b16 %v273
    %v970 = vunpack.c.h.b16 %v273
    %v971 = vunpack.c.l.b16 %v274
    %v972 = vunpack.c.h.b16 %v274
    %v973 = vunpack.c.l.b16 %v275
    %v974 = vunpack.c.h.b16 %v275
    %v975 = vunpack.c.l.b16 %v276
    %v976 = vunpack.c.h.b16 %v276
    %v977 = vunpack.c.l.b16 %v277
    %v978 = vunpack.c.h.b16 %v277
    %v979 = vunpack.c.l.b16 %v278
    %v980 = vunpack.c.h.b16 %v278
    %v981 = vunpack.c.l.b16 %v279
    %v982 = vunpack.c.h.b16 %v279
    %v983 = vunpack.c.l.b16 %v280
    %v984 = vunpack.c.h.b16 %v280
    %v985 = vunpack.c.l.b16 %v281
    %v986 = vunpack.c.h.b16 %v281
    %v987 = vunpack.c.l.b16 %v282
    %v988 = vunpack.c.h.b16 %v282
    %v989 = vunpack.c.l.b16 %v283
    %v990 = vunpack.c.h.b16 %v283
    %v991 = vunpack.c.l.b16 %v284
    %v992 = vunpack.c.h.b16 %v284
    %v993 = vunpack.c.l.b16 %v285
    %v994 = vunpack.c.h.b16 %v285
    %v995 = vunpack.c.l.b16 %v286
    %v996 = vunpack.c.h.b16 %v286
    %v997 = vunpack.c.l.b16 %v287
    %v998 = vunpack.c.h.b16 %v287
    %v999 = vunpack.c.l.b16 %v288
    %v1000 = vunpack.c.h.b16 %v288
    %v1001 = vunpack.c.l.b16 %v289
    %v1002 = vunpack.c.h.b16 %v289
    %v1003 = vunpack.c.l.b16 %v290
    %v1004 = vunpack.c.h.b16 %v290
    %v1005 = vunpack.c.l.b16 %v291
    %v1006 = vunpack.c.h.b16 %v291
    %v1007 = vunpack.c.l.b16 %v292
    %v1008 = vunpack.c.h.b16 %v292
    %v1009 = vunpack.c.l.b16 %v293
    %v1010 = vunpack.c.h.b16 %v293
    %v1011 = vunpack.c.l.b16 %v294
    %v1012 = vunpack.c.h.b16 %v294
    %v1013 = vunpack.c.l.b16 %v295
    %v1014 = vunpack.c.h.b16 %v295
    %v1015 = vunpack.c.l.b16 %v296
    %v1016 = vunpack.c.h.b16 %v296
    %v1017 = vunpack.c.l.b16 %v297
    %v1018 = vunpack.c.h.b16 %v297
    %v1019 = vunpack.c.l.b16 %v298
    %v1020 = vunpack.c.h.b16 %v298
    %v1021 = vunpack.c.l.b16 %v299
    %v1022 = vunpack.c.h.b16 %v299
    %v1023 = vunpack.c.l.b16 %v300
    %v1024 = vunpack.c.h.b16 %v300
    %v1025 = vunpack.c.l.b16 %v301
    %v1026 = vunpack.c.h.b16 %v301
    %v1027 = vunpack.c.l.b16 %v302
    %v1028 = vunpack.c.h.b16 %v302
    %v1029 = vunpack.c.l.b16 %v303
    %v1030 = vunpack.c.h.b16 %v303
    %v1031 = vunpack.c.l.b16 %v304
    %v1032 = vunpack.c.h.b16 %v304
    %v1033 = vunpack.c.l.b16 %v305
    %v1034 = vunpack.c.h.b16 %v305
    %v1035 = vunpack.c.l.b16 %v306
    %v1036 = vunpack.c.h.b16 %v306
    %v1037 = vunpack.c.l.b16 %v307
    %v1038 = vunpack.c.h.b16 %v307
    %v1039 = vunpack.c.l.b16 %v308
    %v1040 = vunpack.c.h.b16 %v308
    %v1041 = vunpack.c.l.b16 %v309
    %v1042 = vunpack.c.h.b16 %v309
    %v1043 = vunpack.c.l.b16 %v310
    %v1044 = vunpack.c.h.b16 %v310
    %v1045 = vunpack.c.l.b16 %v311
    %v1046 = vunpack.c.h.b16 %v311
    %v1047 = vunpack.c.l.b16 %v312
    %v1048 = vunpack.c.h.b16 %v312
    %v1049 = vunpack.c.l.b16 %v313
    %v1050 = vunpack.c.h.b16 %v313
    %v1051 = vunpack.c.l.b16 %v314
    %v1052 = vunpack.c.h.b16 %v314
    %v1053 = vunpack.c.l.b16 %v315
    %v1054 = vunpack.c.h.b16 %v315
    %v1055 = vunpack.c.l.b16 %v316
    %v1056 = vunpack.c.h.b16 %v316
    %v1057 = vunpack.c.l.b16 %v317
    %v1058 = vunpack.c.h.b16 %v317
    %v1059 = vunpack.c.l.b16 %v318
    %v1060 = vunpack.c.h.b16 %v318
    %v1061 = vunpack.c.l.b16 %v319
    %v1062 = vunpack.c.h.b16 %v319
    %v1063 = vunpack.c.l.b16 %v320
    %v1064 = vunpack.c.h.b16 %v320
    %v1065 = vunpack.c.l.b16 %v321
    %v1066 = vunpack.c.h.b16 %v321
    %v1067 = vunpack.c.l.b16 %v322
    %v1068 = vunpack.c.h.b16 %v322
    %v1069 = vunpack.c.l.b16 %v323
    %v1070 = vunpack.c.h.b16 %v323
    %v1071 = vunpack.c.l.b16 %v324
    %v1072 = vunpack.c.h.b16 %v324
    %v1073 = vunpack.c.l.b16 %v325
    %v1074 = vunpack.c.h.b16 %v325
    %v1075 = vunpack.c.l.b16 %v326
    %v1076 = vunpack.c.h.b16 %v326
    %v1077 = vunpack.c.l.b16 %v327
    %v1078 = vunpack.c.h.b16 %v327
    %v1079 = vunpack.c.l.b16 %v328
    %v1080 = vunpack.c.h.b16 %v328
    %v1081 = vunpack.c.l.b16 %v329
    %v1082 = vunpack.c.h.b16 %v329
    %v1083 = vunpack.c.l.b16 %v330
    %v1084 = vunpack.c.h.b16 %v330
    %v1085 = vunpack.c.l.b16 %v331
    %v1086 = vunpack.c.h.b16 %v331
    %v1087 = vunpack.c.l.b16 %v332
    %v1088 = vunpack.c.h.b16 %v332
    %v1089 = vunpack.c.l.b16 %v333
    %v1090 = vunpack.c.h.b16 %v333
    %v1091 = vunpack.c.l.b16 %v334
    %v1092 = vunpack.c.h.b16 %v334
    %v1093 = vunpack.c.l.b16 %v335
    %v1094 = vunpack.c.h.b16 %v335
    %v1095 = vunpack.c.l.b16 %v336
    %v1096 = vunpack.c.h.b16 %v336
    %v1097 = vunpack.c.l.b16 %v337
    %v1098 = vunpack.c.h.b16 %v337
    %v1099 = vunpack.c.l.b16 %v338
    %v1100 = vunpack.c.h.b16 %v338
    %v1101 = vunpack.c.l.b16 %v339
    %v1102 = vunpack.c.h.b16 %v339
    %v1103 = vunpack.c.l.b16 %v340
    %v1104 = vunpack.c.h.b16 %v340
    %v1105 = vunpack.c.l.b16 %v341
    %v1106 = vunpack.c.h.b16 %v341
    %v1107 = vunpack.c.l.b16 %v342
    %v1108 = vunpack.c.h.b16 %v342
    %v1109 = vunpack.c.l.b16 %v343
    %v1110 = vunpack.c.h.b16 %v343
    %v1111 = vunpack.c.l.b16 %v344
    %v1112 = vunpack.c.h.b16 %v344
    %v1113 = vpack.c.b16 %v633, %v601
    %v1114 = vpack.c.b16 %v634, %v602
    %v1115 = vpack.c.b16 %v635, %v603
    %v1116 = vpack.c.b16 %v636, %v604
    %v1117 = vpack.c.b16 %v637, %v605
    %v1118 = vpack.c.b16 %v638, %v606
    %v1119 = vpack.c.b16 %v639, %v607
    %v1120 = vpack.c.b16 %v640, %v608
    %v1121 = vpack.c.b16 %v641, %v609
    %v1122 = vpack.c.b16 %v642, %v610
    %v1123 = vpack.c.b16 %v643, %v611
    %v1124 = vpack.c.b16 %v644, %v612
    %v1125 = vpack.c.b16 %v645, %v613
    %v1126 = vpack.c.b16 %v646, %v614
    %v1127 = vpack.c.b16 %v647, %v615
    %v1128 = vpack.c.b16 %v648, %v616
    %v1129 = vpack.c.b16 %v649, %v617
    %v1130 = vpack.c.b16 %v650, %v618
    %v1131 = vpack.c.b16 %v651, %v619
    %v1132 = vpack.c.b16 %v652, %v620
    %v1133 = vpack.c.b16 %v653, %v621
    %v1134 = vpack.c.b16 %v654, %v622
    %v1135 = vpack.c.b16 %v655, %v623
    %v1136 = vpack.c.b16 %v656, %v624
    %v1137 = vpack.c.b16 %v657, %v625
    %v1138 = vpack.c.b16 %v658, %v626
    %v1139 = vpack.c.b16 %v659, %v627
    %v1140 = vpack.c.b16 %v660, %v628
    %v1141 = vpack.c.b16 %v661, %v629
    %v1142 = vpack.c.b16 %v662, %v630
    %v1143 = vpack.c.b16 %v663, %v631
    %v1144 = vpack.c.b16 %v664, %v632
    %v1145 = vpack.c.b16 %v697, %v665
    %v1146 = vpack.c.b16 %v698, %v666
    %v1147 = vpack.c.b16 %v699, %v667
    %v1148 = vpack.c.b16 %v700, %v668
    %v1149 = vpack.c.b16 %v701, %v669
    %v1150 = vpack.c.b16 %v702, %v670
    %v1151 = vpack.c.b16 %v703, %v671
    %v1152 = vpack.c.b16 %v704, %v672
    %v1153 = vpack.c.b16 %v705, %v673
    %v1154 = vpack.c.b16 %v706, %v674
    %v1155 = vpack.c.b16 %v707, %v675
    %v1156 = vpack.c.b16 %v708, %v676
    %v1157 = vpack.c.b16 %v709, %v677
    %v1158 = vpack.c.b16 %v710, %v678
    %v1159 = vpack.c.b16 %v711, %v679
    %v1160 = vpack.c.b16 %v712, %v680
    %v1161 = vpack.c.b16 %v713, %v681
    %v1162 = vpack.c.b16 %v714, %v682
    %v1163 = vpack.c.b16 %v715, %v683
    %v1164 = vpack.c.b16 %v716, %v684
    %v1165 = vpack.c.b16 %v717, %v685
    %v1166 = vpack.c.b16 %v718, %v686
    %v1167 = vpack.c.b16 %v719, %v687
    %v1168 = vpack.c.b16 %v720, %v688
    %v1169 = vpack.c.b16 %v721, %v689
    %v1170 = vpack.c.b16 %v722, %v690
    %v1171 = vpack.c.b16 %v723, %v691
    %v1172 = vpack.c.b16 %v724, %v692
    %v1173 = vpack.c.b16 %v725, %v693
    %v1174 = vpack.c.b16 %v726, %v694
    %v1175 = vpack.c.b16 %v727, %v695
    %v1176 = vpack.c.b16 %v728, %v696
    %v1177 = vpack.c.b16 %v761, %v729
    %v1178 = vpack.c.b16 %v762, %v730
    %v1179 = vpack.c.b16 %v763, %v731
    %v1180 = vpack.c.b16 %v764, %v732
    %v1181 = vpack.c.b16 %v765, %v733
    %v1182 = vpack.c.b16 %v766, %v734
    %v1183 = vpack.c.b16 %v767, %v735
    %v1184 = vpack.c.b16 %v768, %v736
    %v1185 = vpack.c.b16 %v769, %v737
    %v1186 = vpack.c.b16 %v770, %v738
    %v1187 = vpack.c.b16 %v771, %v739
    %v1188 = vpack.c.b16 %v772, %v740
    %v1189 = vpack.c.b16 %v773, %v741
    %v1190 = vpack.c.b16 %v774, %v742
    %v1191 = vpack.c.b16 %v775, %v743
    %v1192 = vpack.c.b16 %v776, %v744
    %v1193 = vpack.c.b16 %v777, %v745
    %v1194 = vpack.c.b16 %v778, %v746
    %v1195 = vpack.c.b16 %v779, %v747
    %v1196 = vpack.c.b16 %v780, %v748
    %v1197 = vpack.c.b16 %v781, %v749
    %v1198 = vpack.c.b16 %v782, %v750
    %v1199 = vpack.c.b16 %v783, %v751
    %v1200 = vpack.c.b16 %v784, %v752
    %v1201 = vpack.c.b16 %v785, %v753
    %v1202 = vpack.c.b16 %v786, %v754
    %v1203 = vpack.c.b16 %v787, %v755
    %v1204 = vpack.c.b16 %v788, %v756
    %v1205 = vpack.c.b16 %v789, %v757
    %v1206 = vpack.c.b16 %v790, %v758
    %v1207 = vpack.c.b16 %v791, %v759
    %v1208 = vpack.c.b16 %v792, %v760
    %v1209 = vpack.c.b16 %v825, %v793
    %v1210 = vpack.c.b16 %v826, %v794
    %v1211 = vpack.c.b16 %v827, %v795
    %v1212 = vpack.c.b16 %v828, %v796
    %v1213 = vpack.c.b16 %v829, %v797
    %v1214 = vpack.c.b16 %v830, %v798
    %v1215 = vpack.c.b16 %v831, %v799
    %v1216 = vpack.c.b16 %v832, %v800
    %v1217 = vpack.c.b16 %v833, %v801
    %v1218 = vpack.c.b16 %v834, %v802
    %v1219 = vpack.c.b16 %v835, %v803
    %v1220 = vpack.c.b16 %v836, %v804
    %v1221 = vpack.c.b16 %v837, %v805
    %v1222 = vpack.c.b16 %v838, %v806
    %v1223 = vpack.c.b16 %v839, %v807
    %v1224 = vpack.c.b16 %v840, %v808
    %v1225 = vpack.c.b16 %v841, %v809
    %v1226 = vpack.c.b16 %v842, %v810
    %v1227 = vpack.c.b16 %v843, %v811
    %v1228 = vpack.c.b16 %v844, %v812
    %v1229 = vpack.c.b16 %v845, %v813
    %v1230 = vpack.c.b16 %v846, %v814
    %v1231 = vpack.c.b16 %v847, %v815
    %v1232 = vpack.c.b16 %v848, %v816
    %v1233 = vpack.c.b16 %v849, %v817
    %v1234 = vpack.c.b16 %v850, %v818
    %v1235 = vpack.c.b16 %v851, %v819
    %v1236 = vpack.c.b16 %v852, %v820
    %v1237 = vpack.c.b16 %v853, %v821
    %v1238 = vpack.c.b16 %v854, %v822
    %v1239 = vpack.c.b16 %v855, %v823
    %v1240 = vpack.c.b16 %v856, %v824
    %v1241 = vpack.c.b16 %v889, %v857
    %v1242 = vpack.c.b16 %v890, %v858
    %v1243 = vpack.c.b16 %v891, %v859
    %v1244 = vpack.c.b16 %v892, %v860
    %v1245 = vpack.c.b16 %v893, %v861
    %v1246 = vpack.c.b16 %v894, %v862
    %v1247 = vpack.c.b16 %v895, %v863
    %v1248 = vpack.c.b16 %v896, %v864
    %v1249 = vpack.c.b16 %v897, %v865
    %v1250 = vpack.c.b16 %v898, %v866
    %v1251 = vpack.c.b16 %v899, %v867
    %v1252 = vpack.c.b16 %v900, %v868
    %v1253 = vpack.c.b16 %v901, %v869
    %v1254 = vpack.c.b16 %v902, %v870
    %v1255 = vpack.c.b16 %v903, %v871
    %v1256 = vpack.c.b16 %v904, %v872
    %v1257 = vpack.c.b16 %v905, %v873
    %v1258 = vpack.c.b16 %v906, %v874
    %v1259 = vpack.c.b16 %v907, %v875
    %v1260 = vpack.c.b16 %v908, %v876
    %v1261 = vpack.c.b16 %v909, %v877
    %v1262 = vpack.c.b16 %v910, %v878
    %v1263 = vpack.c.b16 %v911, %v879
    %v1264 = vpack.c.b16 %v912, %v880
    %v1265 = vpack.c.b16 %v913, %v881
    %v1266 = vpack.c.b16 %v914, %v882
    %v1267 = vpack.c.b16 %v915, %v883
    %v1268 = vpack.c.b16 %v916, %v884
    %v1269 = vpack.c.b16 %v917, %v885
    %v1270 = vpack.c.b16 %v918, %v886
    %v1271 = vpack.c.b16 %v919, %v887
    %v1272 = vpack.c.b16 %v920, %v888
    %v1273 = vpack.c.b16 %v953, %v921
    %v1274 = vpack.c.b16 %v954, %v922
    %v1275 = vpack.c.b16 %v955, %v923
    %v1276 = vpack.c.b16 %v956, %v924
    %v1277 = vpack.c.b16 %v957, %v925
    %v1278 = vpack.c.b16 %v958, %v926
    %v1279 = vpack.c.b16 %v959, %v927
    %v1280 = vpack.c.b16 %v960, %v928
    %v1281 = vpack.c.b16 %v961, %v929
    %v1282 = vpack.c.b16 %v962, %v930
    %v1283 = vpack.c.b16 %v963, %v931
    %v1284 = vpack.c.b16 %v964, %v932
    %v1285 = vpack.c.b16 %v965, %v933
    %v1286 = vpack.c.b16 %v966, %v934
    %v1287 = vpack.c.b16 %v967, %v935
    %v1288 = vpack.c.b16 %v968, %v936
    %v1289 = vpack.c.b16 %v969, %v937
    %v1290 = vpack.c.b16 %v970, %v938
    %v1291 = vpack.c.b16 %v971, %v939
    %v1292 = vpack.c.b16 %v972, %v940
    %v1293 = vpack.c.b16 %v973, %v941
    %v1294 = vpack.c.b16 %v974, %v942
    %v1295 = vpack.c.b16 %v975, %v943
    %v1296 = vpack.c.b16 %v976, %v944
    %v1297 = vpack.c.b16 %v977, %v945
    %v1298 = vpack.c.b16 %v978, %v946
    %v1299 = vpack.c.b16 %v979, %v947
    %v1300 = vpack.c.b16 %v980, %v948
    %v1301 = vpack.c.b16 %v981, %v949
    %v1302 = vpack.c.b16 %v982, %v950
    %v1303 = vpack.c.b16 %v983, %v951
    %v1304 = vpack.c.b16 %v984, %v952
    %v1305 = vpack.c.b16 %v1017, %v985
    %v1306 = vpack.c.b16 %v1018, %v986
    %v1307 = vpack.c.b16 %v1019, %v987
    %v1308 = vpack.c.b16 %v1020, %v988
    %v1309 = vpack.c.b16 %v1021, %v989
    %v1310 = vpack.c.b16 %v1022, %v990
    %v1311 = vpack.c.b16 %v1023, %v991
    %v1312 = vpack.c.b16 %v1024, %v992
    %v1313 = vpack.c.b16 %v1025, %v993
    %v1314 = vpack.c.b16 %v1026, %v994
    %v1315 = vpack.c.b16 %v1027, %v995
    %v1316 = vpack.c.b16 %v1028, %v996
    %v1317 = vpack.c.b16 %v1029, %v997
    %v1318 = vpack.c.b16 %v1030, %v998
    %v1319 = vpack.c.b16 %v1031, %v999
    %v1320 = vpack.c.b16 %v1032, %v1000
    %v1321 = vpack.c.b16 %v1033, %v1001
    %v1322 = vpack.c.b16 %v1034, %v1002
    %v1323 = vpack.c.b16 %v1035, %v1003
    %v1324 = vpack.c.b16 %v1036, %v1004
    %v1325 = vpack.c.b16 %v1037, %v1005
    %v1326 = vpack.c.b16 %v1038, %v1006
    %v1327 = vpack.c.b16 %v1039, %v1007
    %v1328 = vpack.c.b16 %v1040, %v1008
    %v1329 = vpack.c.b16 %v1041, %v1009
    %v1330 = vpack.c.b16 %v1042, %v1010
    %v1331 = vpack.c.b16 %v1043, %v1011
    %v1332 = vpack.c.b16 %v1044, %v1012
    %v1333 = vpack.c.b16 %v1045, %v1013
    %v1334 = vpack.c.b16 %v1046, %v1014
    %v1335 = vpack.c.b16 %v1047, %v1015
    %v1336 = vpack.c.b16 %v1048, %v1016
    %v1337 = vpack.c.b16 %v1081, %v1049
    %v1338 = vpack.c.b16 %v1082, %v1050
    %v1339 = vpack.c.b16 %v1083, %v1051
    %v1340 = vpack.c.b16 %v1084, %v1052
    %v1341 = vpack.c.b16 %v1085, %v1053
    %v1342 = vpack.c.b16 %v1086, %v1054
    %v1343 = vpack.c.b16 %v1087, %v1055
    %v1344 = vpack.c.b16 %v1088, %v1056
    %v1345 = vpack.c.b16 %v1089, %v1057
    %v1346 = vpack.c.b16 %v1090, %v1058
    %v1347 = vpack.c.b16 %v1091, %v1059
    %v1348 = vpack.c.b16 %v1092, %v1060
    %v1349 = vpack.c.b16 %v1093, %v1061
    %v1350 = vpack.c.b16 %v1094, %v1062
    %v1351 = vpack.c.b16 %v1095, %v1063
    %v1352 = vpack.c.b16 %v1096, %v1064
    %v1353 = vpack.c.b16 %v1097, %v1065
    %v1354 = vpack.c.b16 %v1098, %v1066
    %v1355 = vpack.c.b16 %v1099, %v1067
    %v1356 = vpack.c.b16 %v1100, %v1068
    %v1357 = vpack.c.b16 %v1101, %v1069
    %v1358 = vpack.c.b16 %v1102, %v1070
    %v1359 = vpack.c.b16 %v1103, %v1071
    %v1360 = vpack.c.b16 %v1104, %v1072
    %v1361 = vpack.c.b16 %v1105, %v1073
    %v1362 = vpack.c.b16 %v1106, %v1074
    %v1363 = vpack.c.b16 %v1107, %v1075
    %v1364 = vpack.c.b16 %v1108, %v1076
    %v1365 = vpack.c.b16 %v1109, %v1077
    %v1366 = vpack.c.b16 %v1110, %v1078
    %v1367 = vpack.c.b16 %v1111, %v1079
    %v1368 = vpack.c.b16 %v1112, %v1080
    %1625 = vmatpush.bf16.msra.mxu0 %v1337
    %1626 = vmatpush.bf16.msra.mxu0 %v1305
    %1627 = vmatpush.bf16.msra.mxu0 %v1273
    %1628 = vmatpush.bf16.msra.mxu0 %v1241
    %1629 = vmatpush.bf16.msra.mxu0 %v1209
    %1630 = vmatpush.bf16.msra.mxu0 %v1177
    %1631 = vmatpush.bf16.msra.mxu0 %v1145
    %1632 = vmatpush.bf16.msra.mxu0 %v1113
    %1633 = vmatmul.bf16.gmra.mxu0 %v88
    %v1634 = vpop.f32.mrf.mxu0
    %v1635 = vadd.f32 0.0, %v1634
    %v1636 = vpop.f32.mrf.mxu0
    %v1637 = vadd.f32 0.0, %v1636
    %1638 = vdwg.mxu0
    %1639 = vmatpush.bf16.msra.mxu0 %v1338
    %1640 = vmatpush.bf16.msra.mxu0 %v1306
    %1641 = vmatpush.bf16.msra.mxu0 %v1274
    %1642 = vmatpush.bf16.msra.mxu0 %v1242
    %1643 = vmatpush.bf16.msra.mxu0 %v1210
    %1644 = vmatpush.bf16.msra.mxu0 %v1178
    %1645 = vmatpush.bf16.msra.mxu0 %v1146
    %1646 = vmatpush.bf16.msra.mxu0 %v1114
    %1647 = vmatmul.bf16.gmra.mxu0 %v88
    %v1648 = vpop.f32.mrf.mxu0
    %v1649 = vadd.f32 0.0, %v1648
    %v1650 = vpop.f32.mrf.mxu0
    %v1651 = vadd.f32 0.0, %v1650
    %1652 = vdwg.mxu0
    %1653 = vmatpush.bf16.msra.mxu0 %v1339
    %1654 = vmatpush.bf16.msra.mxu0 %v1307
    %1655 = vmatpush.bf16.msra.mxu0 %v1275
    %1656 = vmatpush.bf16.msra.mxu0 %v1243
    %1657 = vmatpush.bf16.msra.mxu0 %v1211
    %1658 = vmatpush.bf16.msra.mxu0 %v1179
    %1659 = vmatpush.bf16.msra.mxu0 %v1147
    %1660 = vmatpush.bf16.msra.mxu0 %v1115
    %1661 = vmatmul.bf16.gmra.mxu0 %v88
    %v1662 = vpop.f32.mrf.mxu0
    %v1663 = vadd.f32 0.0, %v1662
    %v1664 = vpop.f32.mrf.mxu0
    %v1665 = vadd.f32 0.0, %v1664
    %1666 = vdwg.mxu0
    %1667 = vmatpush.bf16.msra.mxu0 %v1340
    %1668 = vmatpush.bf16.msra.mxu0 %v1308
    %1669 = vmatpush.bf16.msra.mxu0 %v1276
    %1670 = vmatpush.bf16.msra.mxu0 %v1244
    %1671 = vmatpush.bf16.msra.mxu0 %v1212
    %1672 = vmatpush.bf16.msra.mxu0 %v1180
    %1673 = vmatpush.bf16.msra.mxu0 %v1148
    %1674 = vmatpush.bf16.msra.mxu0 %v1116
    %1675 = vmatmul.bf16.gmra.mxu0 %v88
    %v1676 = vpop.f32.mrf.mxu0
    %v1677 = vadd.f32 0.0, %v1676
    %v1678 = vpop.f32.mrf.mxu0
    %v1679 = vadd.f32 0.0, %v1678
    %1680 = vdwg.mxu0
    %1681 = vmatpush.bf16.msra.mxu0 %v1341
    %1682 = vmatpush.bf16.msra.mxu0 %v1309
    %1683 = vmatpush.bf16.msra.mxu0 %v1277
    %1684 = vmatpush.bf16.msra.mxu0 %v1245
    %1685 = vmatpush.bf16.msra.mxu0 %v1213
    %1686 = vmatpush.bf16.msra.mxu0 %v1181
    %1687 = vmatpush.bf16.msra.mxu0 %v1149
    %1688 = vmatpush.bf16.msra.mxu0 %v1117
    %1689 = vmatmul.bf16.gmra.mxu0 %v88
    %v1690 = vpop.f32.mrf.mxu0
    %v1691 = vadd.f32 0.0, %v1690
    %v1692 = vpop.f32.mrf.mxu0
    %v1693 = vadd.f32 0.0, %v1692
    %1694 = vdwg.mxu0
    %1695 = vmatpush.bf16.msra.mxu0 %v1342
    %1696 = vmatpush.bf16.msra.mxu0 %v1310
    %1697 = vmatpush.bf16.msra.mxu0 %v1278
    %1698 = vmatpush.bf16.msra.mxu0 %v1246
    %1699 = vmatpush.bf16.msra.mxu0 %v1214
    %1700 = vmatpush.bf16.msra.mxu0 %v1182
    %1701 = vmatpush.bf16.msra.mxu0 %v1150
    %1702 = vmatpush.bf16.msra.mxu0 %v1118
    %1703 = vmatmul.bf16.gmra.mxu0 %v88
    %v1704 = vpop.f32.mrf.mxu0
    %v1705 = vadd.f32 0.0, %v1704
    %v1706 = vpop.f32.mrf.mxu0
    %v1707 = vadd.f32 0.0, %v1706
    %1708 = vdwg.mxu0
    %1709 = vmatpush.bf16.msra.mxu0 %v1343
    %1710 = vmatpush.bf16.msra.mxu0 %v1311
    %1711 = vmatpush.bf16.msra.mxu0 %v1279
    %1712 = vmatpush.bf16.msra.mxu0 %v1247
    %1713 = vmatpush.bf16.msra.mxu0 %v1215
    %1714 = vmatpush.bf16.msra.mxu0 %v1183
    %1715 = vmatpush.bf16.msra.mxu0 %v1151
    %1716 = vmatpush.bf16.msra.mxu0 %v1119
    %1717 = vmatmul.bf16.gmra.mxu0 %v88
    %v1718 = vpop.f32.mrf.mxu0
    %v1719 = vadd.f32 0.0, %v1718
    %v1720 = vpop.f32.mrf.mxu0
    %v1721 = vadd.f32 0.0, %v1720
    %1722 = vdwg.mxu0
    %1723 = vmatpush.bf16.msra.mxu0 %v1344
    %1724 = vmatpush.bf16.msra.mxu0 %v1312
    %1725 = vmatpush.bf16.msra.mxu0 %v1280
    %1726 = vmatpush.bf16.msra.mxu0 %v1248
    %1727 = vmatpush.bf16.msra.mxu0 %v1216
    %1728 = vmatpush.bf16.msra.mxu0 %v1184
    %1729 = vmatpush.bf16.msra.mxu0 %v1152
    %1730 = vmatpush.bf16.msra.mxu0 %v1120
    %1731 = vmatmul.bf16.gmra.mxu0 %v88
    %v1732 = vpop.f32.mrf.mxu0
    %v1733 = vadd.f32 0.0, %v1732
    %v1734 = vpop.f32.mrf.mxu0
    %v1735 = vadd.f32 0.0, %v1734
    %1736 = vdwg.mxu0
    %1737 = vmatpush.bf16.msra.mxu0 %v1345
    %1738 = vmatpush.bf16.msra.mxu0 %v1313
    %1739 = vmatpush.bf16.msra.mxu0 %v1281
    %1740 = vmatpush.bf16.msra.mxu0 %v1249
    %1741 = vmatpush.bf16.msra.mxu0 %v1217
    %1742 = vmatpush.bf16.msra.mxu0 %v1185
    %1743 = vmatpush.bf16.msra.mxu0 %v1153
    %1744 = vmatpush.bf16.msra.mxu0 %v1121
    %1745 = vmatmul.bf16.gmra.mxu0 %v88
    %v1746 = vpop.f32.mrf.mxu0
    %v1747 = vadd.f32 0.0, %v1746
    %v1748 = vpop.f32.mrf.mxu0
    %v1749 = vadd.f32 0.0, %v1748
    %1750 = vdwg.mxu0
    %1751 = vmatpush.bf16.msra.mxu0 %v1346
    %1752 = vmatpush.bf16.msra.mxu0 %v1314
    %1753 = vmatpush.bf16.msra.mxu0 %v1282
    %1754 = vmatpush.bf16.msra.mxu0 %v1250
    %1755 = vmatpush.bf16.msra.mxu0 %v1218
    %1756 = vmatpush.bf16.msra.mxu0 %v1186
    %1757 = vmatpush.bf16.msra.mxu0 %v1154
    %1758 = vmatpush.bf16.msra.mxu0 %v1122
    %1759 = vmatmul.bf16.gmra.mxu0 %v88
    %v1760 = vpop.f32.mrf.mxu0
    %v1761 = vadd.f32 0.0, %v1760
    %v1762 = vpop.f32.mrf.mxu0
    %v1763 = vadd.f32 0.0, %v1762
    %1764 = vdwg.mxu0
    %1765 = vmatpush.bf16.msra.mxu0 %v1347
    %1766 = vmatpush.bf16.msra.mxu0 %v1315
    %1767 = vmatpush.bf16.msra.mxu0 %v1283
    %1768 = vmatpush.bf16.msra.mxu0 %v1251
    %1769 = vmatpush.bf16.msra.mxu0 %v1219
    %1770 = vmatpush.bf16.msra.mxu0 %v1187
    %1771 = vmatpush.bf16.msra.mxu0 %v1155
    %1772 = vmatpush.bf16.msra.mxu0 %v1123
    %1773 = vmatmul.bf16.gmra.mxu0 %v88
    %v1774 = vpop.f32.mrf.mxu0
    %v1775 = vadd.f32 0.0, %v1774
    %v1776 = vpop.f32.mrf.mxu0
    %v1777 = vadd.f32 0.0, %v1776
    %1778 = vdwg.mxu0
    %1779 = vmatpush.bf16.msra.mxu0 %v1348
    %1780 = vmatpush.bf16.msra.mxu0 %v1316
    %1781 = vmatpush.bf16.msra.mxu0 %v1284
    %1782 = vmatpush.bf16.msra.mxu0 %v1252
    %1783 = vmatpush.bf16.msra.mxu0 %v1220
    %1784 = vmatpush.bf16.msra.mxu0 %v1188
    %1785 = vmatpush.bf16.msra.mxu0 %v1156
    %1786 = vmatpush.bf16.msra.mxu0 %v1124
    %1787 = vmatmul.bf16.gmra.mxu0 %v88
    %v1788 = vpop.f32.mrf.mxu0
    %v1789 = vadd.f32 0.0, %v1788
    %v1790 = vpop.f32.mrf.mxu0
    %v1791 = vadd.f32 0.0, %v1790
    %1792 = vdwg.mxu0
    %1793 = vmatpush.bf16.msra.mxu0 %v1349
    %1794 = vmatpush.bf16.msra.mxu0 %v1317
    %1795 = vmatpush.bf16.msra.mxu0 %v1285
    %1796 = vmatpush.bf16.msra.mxu0 %v1253
    %1797 = vmatpush.bf16.msra.mxu0 %v1221
    %1798 = vmatpush.bf16.msra.mxu0 %v1189
    %1799 = vmatpush.bf16.msra.mxu0 %v1157
    %1800 = vmatpush.bf16.msra.mxu0 %v1125
    %1801 = vmatmul.bf16.gmra.mxu0 %v88
    %v1802 = vpop.f32.mrf.mxu0
    %v1803 = vadd.f32 0.0, %v1802
    %v1804 = vpop.f32.mrf.mxu0
    %v1805 = vadd.f32 0.0, %v1804
    %1806 = vdwg.mxu0
    %1807 = vmatpush.bf16.msra.mxu0 %v1350
    %1808 = vmatpush.bf16.msra.mxu0 %v1318
    %1809 = vmatpush.bf16.msra.mxu0 %v1286
    %1810 = vmatpush.bf16.msra.mxu0 %v1254
    %1811 = vmatpush.bf16.msra.mxu0 %v1222
    %1812 = vmatpush.bf16.msra.mxu0 %v1190
    %1813 = vmatpush.bf16.msra.mxu0 %v1158
    %1814 = vmatpush.bf16.msra.mxu0 %v1126
    %1815 = vmatmul.bf16.gmra.mxu0 %v88
    %v1816 = vpop.f32.mrf.mxu0
    %v1817 = vadd.f32 0.0, %v1816
    %v1818 = vpop.f32.mrf.mxu0
    %v1819 = vadd.f32 0.0, %v1818
    %1820 = vdwg.mxu0
    %1821 = vmatpush.bf16.msra.mxu0 %v1351
    %1822 = vmatpush.bf16.msra.mxu0 %v1319
    %1823 = vmatpush.bf16.msra.mxu0 %v1287
    %1824 = vmatpush.bf16.msra.mxu0 %v1255
    %1825 = vmatpush.bf16.msra.mxu0 %v1223
    %1826 = vmatpush.bf16.msra.mxu0 %v1191
    %1827 = vmatpush.bf16.msra.mxu0 %v1159
    %1828 = vmatpush.bf16.msra.mxu0 %v1127
    %1829 = vmatmul.bf16.gmra.mxu0 %v88
    %v1830 = vpop.f32.mrf.mxu0
    %v1831 = vadd.f32 0.0, %v1830
    %v1832 = vpop.f32.mrf.mxu0
    %v1833 = vadd.f32 0.0, %v1832
    %1834 = vdwg.mxu0
    %1835 = vmatpush.bf16.msra.mxu0 %v1352
    %1836 = vmatpush.bf16.msra.mxu0 %v1320
    %1837 = vmatpush.bf16.msra.mxu0 %v1288
    %1838 = vmatpush.bf16.msra.mxu0 %v1256
    %1839 = vmatpush.bf16.msra.mxu0 %v1224
    %1840 = vmatpush.bf16.msra.mxu0 %v1192
    %1841 = vmatpush.bf16.msra.mxu0 %v1160
    %1842 = vmatpush.bf16.msra.mxu0 %v1128
    %1843 = vmatmul.bf16.gmra.mxu0 %v88
    %v1844 = vpop.f32.mrf.mxu0
    %v1845 = vadd.f32 0.0, %v1844
    %v1846 = vpop.f32.mrf.mxu0
    %v1847 = vadd.f32 0.0, %v1846
    %1848 = vdwg.mxu0
    %1849 = vmatpush.bf16.msra.mxu0 %v1353
    %1850 = vmatpush.bf16.msra.mxu0 %v1321
    %1851 = vmatpush.bf16.msra.mxu0 %v1289
    %1852 = vmatpush.bf16.msra.mxu0 %v1257
    %1853 = vmatpush.bf16.msra.mxu0 %v1225
    %1854 = vmatpush.bf16.msra.mxu0 %v1193
    %1855 = vmatpush.bf16.msra.mxu0 %v1161
    %1856 = vmatpush.bf16.msra.mxu0 %v1129
    %1857 = vmatmul.bf16.gmra.mxu0 %v88
    %v1858 = vpop.f32.mrf.mxu0
    %v1859 = vadd.f32 0.0, %v1858
    %v1860 = vpop.f32.mrf.mxu0
    %v1861 = vadd.f32 0.0, %v1860
    %1862 = vdwg.mxu0
    %1863 = vmatpush.bf16.msra.mxu0 %v1354
    %1864 = vmatpush.bf16.msra.mxu0 %v1322
    %1865 = vmatpush.bf16.msra.mxu0 %v1290
    %1866 = vmatpush.bf16.msra.mxu0 %v1258
    %1867 = vmatpush.bf16.msra.mxu0 %v1226
    %1868 = vmatpush.bf16.msra.mxu0 %v1194
    %1869 = vmatpush.bf16.msra.mxu0 %v1162
    %1870 = vmatpush.bf16.msra.mxu0 %v1130
    %1871 = vmatmul.bf16.gmra.mxu0 %v88
    %v1872 = vpop.f32.mrf.mxu0
    %v1873 = vadd.f32 0.0, %v1872
    %v1874 = vpop.f32.mrf.mxu0
    %v1875 = vadd.f32 0.0, %v1874
    %1876 = vdwg.mxu0
    %1877 = vmatpush.bf16.msra.mxu0 %v1355
    %1878 = vmatpush.bf16.msra.mxu0 %v1323
    %1879 = vmatpush.bf16.msra.mxu0 %v1291
    %1880 = vmatpush.bf16.msra.mxu0 %v1259
    %1881 = vmatpush.bf16.msra.mxu0 %v1227
    %1882 = vmatpush.bf16.msra.mxu0 %v1195
    %1883 = vmatpush.bf16.msra.mxu0 %v1163
    %1884 = vmatpush.bf16.msra.mxu0 %v1131
    %1885 = vmatmul.bf16.gmra.mxu0 %v88
    %v1886 = vpop.f32.mrf.mxu0
    %v1887 = vadd.f32 0.0, %v1886
    %v1888 = vpop.f32.mrf.mxu0
    %v1889 = vadd.f32 0.0, %v1888
    %1890 = vdwg.mxu0
    %1891 = vmatpush.bf16.msra.mxu0 %v1356
    %1892 = vmatpush.bf16.msra.mxu0 %v1324
    %1893 = vmatpush.bf16.msra.mxu0 %v1292
    %1894 = vmatpush.bf16.msra.mxu0 %v1260
    %1895 = vmatpush.bf16.msra.mxu0 %v1228
    %1896 = vmatpush.bf16.msra.mxu0 %v1196
    %1897 = vmatpush.bf16.msra.mxu0 %v1164
    %1898 = vmatpush.bf16.msra.mxu0 %v1132
    %1899 = vmatmul.bf16.gmra.mxu0 %v88
    %v1900 = vpop.f32.mrf.mxu0
    %v1901 = vadd.f32 0.0, %v1900
    %v1902 = vpop.f32.mrf.mxu0
    %v1903 = vadd.f32 0.0, %v1902
    %1904 = vdwg.mxu0
    %1905 = vmatpush.bf16.msra.mxu0 %v1357
    %1906 = vmatpush.bf16.msra.mxu0 %v1325
    %1907 = vmatpush.bf16.msra.mxu0 %v1293
    %1908 = vmatpush.bf16.msra.mxu0 %v1261
    %1909 = vmatpush.bf16.msra.mxu0 %v1229
    %1910 = vmatpush.bf16.msra.mxu0 %v1197
    %1911 = vmatpush.bf16.msra.mxu0 %v1165
    %1912 = vmatpush.bf16.msra.mxu0 %v1133
    %1913 = vmatmul.bf16.gmra.mxu0 %v88
    %v1914 = vpop.f32.mrf.mxu0
    %v1915 = vadd.f32 0.0, %v1914
    %v1916 = vpop.f32.mrf.mxu0
    %v1917 = vadd.f32 0.0, %v1916
    %1918 = vdwg.mxu0
    %1919 = vmatpush.bf16.msra.mxu0 %v1358
    %1920 = vmatpush.bf16.msra.mxu0 %v1326
    %1921 = vmatpush.bf16.msra.mxu0 %v1294
    %1922 = vmatpush.bf16.msra.mxu0 %v1262
    %1923 = vmatpush.bf16.msra.mxu0 %v1230
    %1924 = vmatpush.bf16.msra.mxu0 %v1198
    %1925 = vmatpush.bf16.msra.mxu0 %v1166
    %1926 = vmatpush.bf16.msra.mxu0 %v1134
    %1927 = vmatmul.bf16.gmra.mxu0 %v88
    %v1928 = vpop.f32.mrf.mxu0
    %v1929 = vadd.f32 0.0, %v1928
    %v1930 = vpop.f32.mrf.mxu0
    %v1931 = vadd.f32 0.0, %v1930
    %1932 = vdwg.mxu0
    %1933 = vmatpush.bf16.msra.mxu0 %v1359
    %1934 = vmatpush.bf16.msra.mxu0 %v1327
    %1935 = vmatpush.bf16.msra.mxu0 %v1295
    %1936 = vmatpush.bf16.msra.mxu0 %v1263
    %1937 = vmatpush.bf16.msra.mxu0 %v1231
    %1938 = vmatpush.bf16.msra.mxu0 %v1199
    %1939 = vmatpush.bf16.msra.mxu0 %v1167
    %1940 = vmatpush.bf16.msra.mxu0 %v1135
    %1941 = vmatmul.bf16.gmra.mxu0 %v88
    %v1942 = vpop.f32.mrf.mxu0
    %v1943 = vadd.f32 0.0, %v1942
    %v1944 = vpop.f32.mrf.mxu0
    %v1945 = vadd.f32 0.0, %v1944
    %1946 = vdwg.mxu0
    %1947 = vmatpush.bf16.msra.mxu0 %v1360
    %1948 = vmatpush.bf16.msra.mxu0 %v1328
    %1949 = vmatpush.bf16.msra.mxu0 %v1296
    %1950 = vmatpush.bf16.msra.mxu0 %v1264
    %1951 = vmatpush.bf16.msra.mxu0 %v1232
    %1952 = vmatpush.bf16.msra.mxu0 %v1200
    %1953 = vmatpush.bf16.msra.mxu0 %v1168
    %1954 = vmatpush.bf16.msra.mxu0 %v1136
    %1955 = vmatmul.bf16.gmra.mxu0 %v88
    %v1956 = vpop.f32.mrf.mxu0
    %v1957 = vadd.f32 0.0, %v1956
    %v1958 = vpop.f32.mrf.mxu0
    %v1959 = vadd.f32 0.0, %v1958
    %1960 = vdwg.mxu0
    %1961 = vmatpush.bf16.msra.mxu0 %v1361
    %1962 = vmatpush.bf16.msra.mxu0 %v1329
    %1963 = vmatpush.bf16.msra.mxu0 %v1297
    %1964 = vmatpush.bf16.msra.mxu0 %v1265
    %1965 = vmatpush.bf16.msra.mxu0 %v1233
    %1966 = vmatpush.bf16.msra.mxu0 %v1201
    %1967 = vmatpush.bf16.msra.mxu0 %v1169
    %1968 = vmatpush.bf16.msra.mxu0 %v1137
    %1969 = vmatmul.bf16.gmra.mxu0 %v88
    %v1970 = vpop.f32.mrf.mxu0
    %v1971 = vadd.f32 0.0, %v1970
    %v1972 = vpop.f32.mrf.mxu0
    %v1973 = vadd.f32 0.0, %v1972
    %1974 = vdwg.mxu0
    %1975 = vmatpush.bf16.msra.mxu0 %v1362
    %1976 = vmatpush.bf16.msra.mxu0 %v1330
    %1977 = vmatpush.bf16.msra.mxu0 %v1298
    %1978 = vmatpush.bf16.msra.mxu0 %v1266
    %1979 = vmatpush.bf16.msra.mxu0 %v1234
    %1980 = vmatpush.bf16.msra.mxu0 %v1202
    %1981 = vmatpush.bf16.msra.mxu0 %v1170
    %1982 = vmatpush.bf16.msra.mxu0 %v1138
    %1983 = vmatmul.bf16.gmra.mxu0 %v88
    %v1984 = vpop.f32.mrf.mxu0
    %v1985 = vadd.f32 0.0, %v1984
    %v1986 = vpop.f32.mrf.mxu0
    %v1987 = vadd.f32 0.0, %v1986
    %1988 = vdwg.mxu0
    %1989 = vmatpush.bf16.msra.mxu0 %v1363
    %1990 = vmatpush.bf16.msra.mxu0 %v1331
    %1991 = vmatpush.bf16.msra.mxu0 %v1299
    %1992 = vmatpush.bf16.msra.mxu0 %v1267
    %1993 = vmatpush.bf16.msra.mxu0 %v1235
    %1994 = vmatpush.bf16.msra.mxu0 %v1203
    %1995 = vmatpush.bf16.msra.mxu0 %v1171
    %1996 = vmatpush.bf16.msra.mxu0 %v1139
    %1997 = vmatmul.bf16.gmra.mxu0 %v88
    %v1998 = vpop.f32.mrf.mxu0
    %v1999 = vadd.f32 0.0, %v1998
    %v2000 = vpop.f32.mrf.mxu0
    %v2001 = vadd.f32 0.0, %v2000
    %2002 = vdwg.mxu0
    %2003 = vmatpush.bf16.msra.mxu0 %v1364
    %2004 = vmatpush.bf16.msra.mxu0 %v1332
    %2005 = vmatpush.bf16.msra.mxu0 %v1300
    %2006 = vmatpush.bf16.msra.mxu0 %v1268
    %2007 = vmatpush.bf16.msra.mxu0 %v1236
    %2008 = vmatpush.bf16.msra.mxu0 %v1204
    %2009 = vmatpush.bf16.msra.mxu0 %v1172
    %2010 = vmatpush.bf16.msra.mxu0 %v1140
    %2011 = vmatmul.bf16.gmra.mxu0 %v88
    %v2012 = vpop.f32.mrf.mxu0
    %v2013 = vadd.f32 0.0, %v2012
    %v2014 = vpop.f32.mrf.mxu0
    %v2015 = vadd.f32 0.0, %v2014
    %2016 = vdwg.mxu0
    %2017 = vmatpush.bf16.msra.mxu0 %v1365
    %2018 = vmatpush.bf16.msra.mxu0 %v1333
    %2019 = vmatpush.bf16.msra.mxu0 %v1301
    %2020 = vmatpush.bf16.msra.mxu0 %v1269
    %2021 = vmatpush.bf16.msra.mxu0 %v1237
    %2022 = vmatpush.bf16.msra.mxu0 %v1205
    %2023 = vmatpush.bf16.msra.mxu0 %v1173
    %2024 = vmatpush.bf16.msra.mxu0 %v1141
    %2025 = vmatmul.bf16.gmra.mxu0 %v88
    %v2026 = vpop.f32.mrf.mxu0
    %v2027 = vadd.f32 0.0, %v2026
    %v2028 = vpop.f32.mrf.mxu0
    %v2029 = vadd.f32 0.0, %v2028
    %2030 = vdwg.mxu0
    %2031 = vmatpush.bf16.msra.mxu0 %v1366
    %2032 = vmatpush.bf16.msra.mxu0 %v1334
    %2033 = vmatpush.bf16.msra.mxu0 %v1302
    %2034 = vmatpush.bf16.msra.mxu0 %v1270
    %2035 = vmatpush.bf16.msra.mxu0 %v1238
    %2036 = vmatpush.bf16.msra.mxu0 %v1206
    %2037 = vmatpush.bf16.msra.mxu0 %v1174
    %2038 = vmatpush.bf16.msra.mxu0 %v1142
    %2039 = vmatmul.bf16.gmra.mxu0 %v88
    %v2040 = vpop.f32.mrf.mxu0
    %v2041 = vadd.f32 0.0, %v2040
    %v2042 = vpop.f32.mrf.mxu0
    %v2043 = vadd.f32 0.0, %v2042
    %2044 = vdwg.mxu0
    %2045 = vmatpush.bf16.msra.mxu0 %v1367
    %2046 = vmatpush.bf16.msra.mxu0 %v1335
    %2047 = vmatpush.bf16.msra.mxu0 %v1303
    %2048 = vmatpush.bf16.msra.mxu0 %v1271
    %2049 = vmatpush.bf16.msra.mxu0 %v1239
    %2050 = vmatpush.bf16.msra.mxu0 %v1207
    %2051 = vmatpush.bf16.msra.mxu0 %v1175
    %2052 = vmatpush.bf16.msra.mxu0 %v1143
    %2053 = vmatmul.bf16.gmra.mxu0 %v88
    %v2054 = vpop.f32.mrf.mxu0
    %v2055 = vadd.f32 0.0, %v2054
    %v2056 = vpop.f32.mrf.mxu0
    %v2057 = vadd.f32 0.0, %v2056
    %2058 = vdwg.mxu0
    %2059 = vmatpush.bf16.msra.mxu0 %v1368
    %2060 = vmatpush.bf16.msra.mxu0 %v1336
    %2061 = vmatpush.bf16.msra.mxu0 %v1304
    %2062 = vmatpush.bf16.msra.mxu0 %v1272
    %2063 = vmatpush.bf16.msra.mxu0 %v1240
    %2064 = vmatpush.bf16.msra.mxu0 %v1208
    %2065 = vmatpush.bf16.msra.mxu0 %v1176
    %2066 = vmatpush.bf16.msra.mxu0 %v1144
    %2067 = vmatmul.bf16.gmra.mxu0 %v88
    %v2068 = vpop.f32.mrf.mxu0
    %v2069 = vadd.f32 0.0, %v2068
    %v2070 = vpop.f32.mrf.mxu0
    %v2071 = vadd.f32 0.0, %v2070
    %2072 = vdwg.mxu0
    %v2073 = vpack.c.bf16 %v1649, %v1635
    %v2074 = vpack.c.bf16 %v1677, %v1663
    %v2075 = vpack.c.bf16 %v1705, %v1691
    %v2076 = vpack.c.bf16 %v1733, %v1719
    %v2077 = vpack.c.bf16 %v1761, %v1747
    %v2078 = vpack.c.bf16 %v1789, %v1775
    %v2079 = vpack.c.bf16 %v1817, %v1803
    %v2080 = vpack.c.bf16 %v1845, %v1831
    %v2081 = vpack.c.bf16 %v1873, %v1859
    %v2082 = vpack.c.bf16 %v1901, %v1887
    %v2083 = vpack.c.bf16 %v1929, %v1915
    %v2084 = vpack.c.bf16 %v1957, %v1943
    %v2085 = vpack.c.bf16 %v1985, %v1971
    %v2086 = vpack.c.bf16 %v2013, %v1999
    %v2087 = vpack.c.bf16 %v2041, %v2027
    %v2088 = vpack.c.bf16 %v2069, %v2055
    %v2089 = vpack.c.bf16 %v1651, %v1637
    %v2090 = vpack.c.bf16 %v1679, %v1665
    %v2091 = vpack.c.bf16 %v1707, %v1693
    %v2092 = vpack.c.bf16 %v1735, %v1721
    %v2093 = vpack.c.bf16 %v1763, %v1749
    %v2094 = vpack.c.bf16 %v1791, %v1777
    %v2095 = vpack.c.bf16 %v1819, %v1805
    %v2096 = vpack.c.bf16 %v1847, %v1833
    %v2097 = vpack.c.bf16 %v1875, %v1861
    %v2098 = vpack.c.bf16 %v1903, %v1889
    %v2099 = vpack.c.bf16 %v1931, %v1917
    %v2100 = vpack.c.bf16 %v1959, %v1945
    %v2101 = vpack.c.bf16 %v1987, %v1973
    %v2102 = vpack.c.bf16 %v2015, %v2001
    %v2103 = vpack.c.bf16 %v2043, %v2029
    %v2104 = vpack.c.bf16 %v2071, %v2057
    %v2105 = vld [vmem:[#allocation5] sm:$0xff]
    %v2106 = vld [vmem:[#allocation5 + $0x8] sm:$0xff]
    %v2107 = vld [vmem:[#allocation5 + $0x10] sm:$0xff]
    %v2108 = vld [vmem:[#allocation5 + $0x18] sm:$0xff]
    %2110 = vst [vmem:[#allocation1] ss:$9 sm:$0xff] %v2105
    %v2111 = vld [vmem:[#allocation1] sm:$0xff]
    %v2112 = vld [vmem:[#allocation1 + $0x9] sm:$0xff]
    %v2113 = vld [vmem:[#allocation1 + $0x12] sm:$0xff]
    %v2114 = vld [vmem:[#allocation1 + $0x1b] sm:$0xff]
    %v2115 = vld [vmem:[#allocation1 + $0x24] sm:$0xff]
    %v2116 = vld [vmem:[#allocation1 + $0x2d] sm:$0xff]
    %v2117 = vld [vmem:[#allocation1 + $0x36] sm:$0xff]
    %v2118 = vld [vmem:[#allocation1 + $0x3f] sm:$0xff]
    %2120 = vst [vmem:[#allocation1] ss:$9 sm:$0xff] %v2106
    %v2121 = vld [vmem:[#allocation1] sm:$0xff]
    %v2122 = vld [vmem:[#allocation1 + $0x9] sm:$0xff]
    %v2123 = vld [vmem:[#allocation1 + $0x12] sm:$0xff]
    %v2124 = vld [vmem:[#allocation1 + $0x1b] sm:$0xff]
    %v2125 = vld [vmem:[#allocation1 + $0x24] sm:$0xff]
    %v2126 = vld [vmem:[#allocation1 + $0x2d] sm:$0xff]
    %v2127 = vld [vmem:[#allocation1 + $0x36] sm:$0xff]
    %v2128 = vld [vmem:[#allocation1 + $0x3f] sm:$0xff]
    %2130 = vst [vmem:[#allocation1] ss:$9 sm:$0xff] %v2107
    %v2131 = vld [vmem:[#allocation1] sm:$0xff]
    %v2132 = vld [vmem:[#allocation1 + $0x9] sm:$0xff]
    %v2133 = vld [vmem:[#allocation1 + $0x12] sm:$0xff]
    %v2134 = vld [vmem:[#allocation1 + $0x1b] sm:$0xff]
    %v2135 = vld [vmem:[#allocation1 + $0x24] sm:$0xff]
    %v2136 = vld [vmem:[#allocation1 + $0x2d] sm:$0xff]
    %v2137 = vld [vmem:[#allocation1 + $0x36] sm:$0xff]
    %v2138 = vld [vmem:[#allocation1 + $0x3f] sm:$0xff]
    %2140 = vst [vmem:[#allocation1] ss:$9 sm:$0xff] %v2108
    %v2141 = vld [vmem:[#allocation1] sm:$0xff]
    %v2142 = vld [vmem:[#allocation1 + $0x9] sm:$0xff]
    %v2143 = vld [vmem:[#allocation1 + $0x12] sm:$0xff]
    %v2144 = vld [vmem:[#allocation1 + $0x1b] sm:$0xff]
    %v2145 = vld [vmem:[#allocation1 + $0x24] sm:$0xff]
    %v2146 = vld [vmem:[#allocation1 + $0x2d] sm:$0xff]
    %v2147 = vld [vmem:[#allocation1 + $0x36] sm:$0xff]
    %v2148 = vld [vmem:[#allocation1 + $0x3f] sm:$0xff]
    %v2149 = vpack.i.b16 %v2111, %v2111
    %v2151 = vperm.slane %v2149, 0
    %v2152 = vpack.i.b16 %v2112, %v2112
    %v2154 = vperm.slane %v2152, 0
    %v2155 = vpack.i.b16 %v2113, %v2113
    %v2157 = vperm.slane %v2155, 0
    %v2158 = vpack.i.b16 %v2114, %v2114
    %v2160 = vperm.slane %v2158, 0
    %v2161 = vpack.i.b16 %v2115, %v2115
    %v2163 = vperm.slane %v2161, 0
    %v2164 = vpack.i.b16 %v2116, %v2116
    %v2166 = vperm.slane %v2164, 0
    %v2167 = vpack.i.b16 %v2117, %v2117
    %v2169 = vperm.slane %v2167, 0
    %v2170 = vpack.i.b16 %v2118, %v2118
    %v2172 = vperm.slane %v2170, 0
    %v2173 = vpack.i.b16 %v2121, %v2121
    %v2175 = vperm.slane %v2173, 0
    %v2176 = vpack.i.b16 %v2122, %v2122
    %v2178 = vperm.slane %v2176, 0
    %v2179 = vpack.i.b16 %v2123, %v2123
    %v2181 = vperm.slane %v2179, 0
    %v2182 = vpack.i.b16 %v2124, %v2124
    %v2184 = vperm.slane %v2182, 0
    %v2185 = vpack.i.b16 %v2125, %v2125
    %v2187 = vperm.slane %v2185, 0
    %v2188 = vpack.i.b16 %v2126, %v2126
    %v2190 = vperm.slane %v2188, 0
    %v2191 = vpack.i.b16 %v2127, %v2127
    %v2193 = vperm.slane %v2191, 0
    %v2194 = vpack.i.b16 %v2128, %v2128
    %v2196 = vperm.slane %v2194, 0
    %v2197 = vpack.i.b16 %v2131, %v2131
    %v2199 = vperm.slane %v2197, 0
    %v2200 = vpack.i.b16 %v2132, %v2132
    %v2202 = vperm.slane %v2200, 0
    %v2203 = vpack.i.b16 %v2133, %v2133
    %v2205 = vperm.slane %v2203, 0
    %v2206 = vpack.i.b16 %v2134, %v2134
    %v2208 = vperm.slane %v2206, 0
    %v2209 = vpack.i.b16 %v2135, %v2135
    %v2211 = vperm.slane %v2209, 0
    %v2212 = vpack.i.b16 %v2136, %v2136
    %v2214 = vperm.slane %v2212, 0
    %v2215 = vpack.i.b16 %v2137, %v2137
    %v2217 = vperm.slane %v2215, 0
    %v2218 = vpack.i.b16 %v2138, %v2138
    %v2220 = vperm.slane %v2218, 0
    %v2221 = vpack.i.b16 %v2141, %v2141
    %v2223 = vperm.slane %v2221, 0
    %v2224 = vpack.i.b16 %v2142, %v2142
    %v2226 = vperm.slane %v2224, 0
    %v2227 = vpack.i.b16 %v2143, %v2143
    %v2229 = vperm.slane %v2227, 0
    %v2230 = vpack.i.b16 %v2144, %v2144
    %v2232 = vperm.slane %v2230, 0
    %v2233 = vpack.i.b16 %v2145, %v2145
    %v2235 = vperm.slane %v2233, 0
    %v2236 = vpack.i.b16 %v2146, %v2146
    %v2238 = vperm.slane %v2236, 0
    %v2239 = vpack.i.b16 %v2147, %v2147
    %v2241 = vperm.slane %v2239, 0
    %v2242 = vpack.i.b16 %v2148, %v2148
    %v2244 = vperm.slane %v2242, 0
    %v2245 = vunpack.c.l.bf16 %v2073
    %v2246 = vunpack.c.h.bf16 %v2073
    %v2247 = vunpack.c.l.bf16 %v2074
    %v2248 = vunpack.c.h.bf16 %v2074
    %v2249 = vunpack.c.l.bf16 %v2075
    %v2250 = vunpack.c.h.bf16 %v2075
    %v2251 = vunpack.c.l.bf16 %v2076
    %v2252 = vunpack.c.h.bf16 %v2076
    %v2253 = vunpack.c.l.bf16 %v2077
    %v2254 = vunpack.c.h.bf16 %v2077
    %v2255 = vunpack.c.l.bf16 %v2078
    %v2256 = vunpack.c.h.bf16 %v2078
    %v2257 = vunpack.c.l.bf16 %v2079
    %v2258 = vunpack.c.h.bf16 %v2079
    %v2259 = vunpack.c.l.bf16 %v2080
    %v2260 = vunpack.c.h.bf16 %v2080
    %v2261 = vunpack.c.l.bf16 %v2081
    %v2262 = vunpack.c.h.bf16 %v2081
    %v2263 = vunpack.c.l.bf16 %v2082
    %v2264 = vunpack.c.h.bf16 %v2082
    %v2265 = vunpack.c.l.bf16 %v2083
    %v2266 = vunpack.c.h.bf16 %v2083
    %v2267 = vunpack.c.l.bf16 %v2084
    %v2268 = vunpack.c.h.bf16 %v2084
    %v2269 = vunpack.c.l.bf16 %v2085
    %v2270 = vunpack.c.h.bf16 %v2085
    %v2271 = vunpack.c.l.bf16 %v2086
    %v2272 = vunpack.c.h.bf16 %v2086
    %v2273 = vunpack.c.l.bf16 %v2087
    %v2274 = vunpack.c.h.bf16 %v2087
    %v2275 = vunpack.c.l.bf16 %v2088
    %v2276 = vunpack.c.h.bf16 %v2088
    %v2277 = vunpack.c.l.bf16 %v2089
    %v2278 = vunpack.c.h.bf16 %v2089
    %v2279 = vunpack.c.l.bf16 %v2090
    %v2280 = vunpack.c.h.bf16 %v2090
    %v2281 = vunpack.c.l.bf16 %v2091
    %v2282 = vunpack.c.h.bf16 %v2091
    %v2283 = vunpack.c.l.bf16 %v2092
    %v2284 = vunpack.c.h.bf16 %v2092
    %v2285 = vunpack.c.l.bf16 %v2093
    %v2286 = vunpack.c.h.bf16 %v2093
    %v2287 = vunpack.c.l.bf16 %v2094
    %v2288 = vunpack.c.h.bf16 %v2094
    %v2289 = vunpack.c.l.bf16 %v2095
    %v2290 = vunpack.c.h.bf16 %v2095
    %v2291 = vunpack.c.l.bf16 %v2096
    %v2292 = vunpack.c.h.bf16 %v2096
    %v2293 = vunpack.c.l.bf16 %v2097
    %v2294 = vunpack.c.h.bf16 %v2097
    %v2295 = vunpack.c.l.bf16 %v2098
    %v2296 = vunpack.c.h.bf16 %v2098
    %v2297 = vunpack.c.l.bf16 %v2099
    %v2298 = vunpack.c.h.bf16 %v2099
    %v2299 = vunpack.c.l.bf16 %v2100
    %v2300 = vunpack.c.h.bf16 %v2100
    %v2301 = vunpack.c.l.bf16 %v2101
    %v2302 = vunpack.c.h.bf16 %v2101
    %v2303 = vunpack.c.l.bf16 %v2102
    %v2304 = vunpack.c.h.bf16 %v2102
    %v2305 = vunpack.c.l.bf16 %v2103
    %v2306 = vunpack.c.h.bf16 %v2103
    %v2307 = vunpack.c.l.bf16 %v2104
    %v2308 = vunpack.c.h.bf16 %v2104
    %v2309 = vunpack.c.l.bf16 %v2151
    %v2310 = vunpack.c.l.bf16 %v2154
    %v2311 = vunpack.c.l.bf16 %v2157
    %v2312 = vunpack.c.l.bf16 %v2160
    %v2313 = vunpack.c.l.bf16 %v2163
    %v2314 = vunpack.c.l.bf16 %v2166
    %v2315 = vunpack.c.l.bf16 %v2169
    %v2316 = vunpack.c.l.bf16 %v2172
    %v2317 = vunpack.c.l.bf16 %v2175
    %v2318 = vunpack.c.l.bf16 %v2178
    %v2319 = vunpack.c.l.bf16 %v2181
    %v2320 = vunpack.c.l.bf16 %v2184
    %v2321 = vunpack.c.l.bf16 %v2187
    %v2322 = vunpack.c.l.bf16 %v2190
    %v2323 = vunpack.c.l.bf16 %v2193
    %v2324 = vunpack.c.l.bf16 %v2196
    %v2325 = vunpack.c.l.bf16 %v2199
    %v2326 = vunpack.c.l.bf16 %v2202
    %v2327 = vunpack.c.l.bf16 %v2205
    %v2328 = vunpack.c.l.bf16 %v2208
    %v2329 = vunpack.c.l.bf16 %v2211
    %v2330 = vunpack.c.l.bf16 %v2214
    %v2331 = vunpack.c.l.bf16 %v2217
    %v2332 = vunpack.c.l.bf16 %v2220
    %v2333 = vunpack.c.l.bf16 %v2223
    %v2334 = vunpack.c.l.bf16 %v2226
    %v2335 = vunpack.c.l.bf16 %v2229
    %v2336 = vunpack.c.l.bf16 %v2232
    %v2337 = vunpack.c.l.bf16 %v2235
    %v2338 = vunpack.c.l.bf16 %v2238
    %v2339 = vunpack.c.l.bf16 %v2241
    %v2340 = vunpack.c.l.bf16 %v2244
    %v2341 = vadd.f32 %v2245, %v2309
    %v2342 = vadd.f32 %v2246, %v2310
    %v2343 = vadd.f32 %v2247, %v2311
    %v2344 = vadd.f32 %v2248, %v2312
    %v2345 = vadd.f32 %v2249, %v2313
    %v2346 = vadd.f32 %v2250, %v2314
    %v2347 = vadd.f32 %v2251, %v2315
    %v2348 = vadd.f32 %v2252, %v2316
    %v2349 = vadd.f32 %v2253, %v2317
    %v2350 = vadd.f32 %v2254, %v2318
    %v2351 = vadd.f32 %v2255, %v2319
    %v2352 = vadd.f32 %v2256, %v2320
    %v2353 = vadd.f32 %v2257, %v2321
    %v2354 = vadd.f32 %v2258, %v2322
    %v2355 = vadd.f32 %v2259, %v2323
    %v2356 = vadd.f32 %v2260, %v2324
    %v2357 = vadd.f32 %v2261, %v2325
    %v2358 = vadd.f32 %v2262, %v2326
    %v2359 = vadd.f32 %v2263, %v2327
    %v2360 = vadd.f32 %v2264, %v2328
    %v2361 = vadd.f32 %v2265, %v2329
    %v2362 = vadd.f32 %v2266, %v2330
    %v2363 = vadd.f32 %v2267, %v2331
    %v2364 = vadd.f32 %v2268, %v2332
    %v2365 = vadd.f32 %v2269, %v2333
    %v2366 = vadd.f32 %v2270, %v2334
    %v2367 = vadd.f32 %v2271, %v2335
    %v2368 = vadd.f32 %v2272, %v2336
    %v2369 = vadd.f32 %v2273, %v2337
    %v2370 = vadd.f32 %v2274, %v2338
    %v2371 = vadd.f32 %v2275, %v2339
    %v2372 = vadd.f32 %v2276, %v2340
    %v2373 = vadd.f32 %v2277, %v2309
    %v2374 = vadd.f32 %v2278, %v2310
    %v2375 = vadd.f32 %v2279, %v2311
    %v2376 = vadd.f32 %v2280, %v2312
    %v2377 = vadd.f32 %v2281, %v2313
    %v2378 = vadd.f32 %v2282, %v2314
    %v2379 = vadd.f32 %v2283, %v2315
    %v2380 = vadd.f32 %v2284, %v2316
    %v2381 = vadd.f32 %v2285, %v2317
    %v2382 = vadd.f32 %v2286, %v2318
    %v2383 = vadd.f32 %v2287, %v2319
    %v2384 = vadd.f32 %v2288, %v2320
    %v2385 = vadd.f32 %v2289, %v2321
    %v2386 = vadd.f32 %v2290, %v2322
    %v2387 = vadd.f32 %v2291, %v2323
    %v2388 = vadd.f32 %v2292, %v2324
    %v2389 = vadd.f32 %v2293, %v2325
    %v2390 = vadd.f32 %v2294, %v2326
    %v2391 = vadd.f32 %v2295, %v2327
    %v2392 = vadd.f32 %v2296, %v2328
    %v2393 = vadd.f32 %v2297, %v2329
    %v2394 = vadd.f32 %v2298, %v2330
    %v2395 = vadd.f32 %v2299, %v2331
    %v2396 = vadd.f32 %v2300, %v2332
    %v2397 = vadd.f32 %v2301, %v2333
    %v2398 = vadd.f32 %v2302, %v2334
    %v2399 = vadd.f32 %v2303, %v2335
    %v2400 = vadd.f32 %v2304, %v2336
    %v2401 = vadd.f32 %v2305, %v2337
    %v2402 = vadd.f32 %v2306, %v2338
    %v2403 = vadd.f32 %v2307, %v2339
    %v2404 = vadd.f32 %v2308, %v2340
    %v2405 = vpack.c.bf16 %v2342, %v2341
    %v2406 = vpack.c.bf16 %v2344, %v2343
    %v2407 = vpack.c.bf16 %v2346, %v2345
    %v2408 = vpack.c.bf16 %v2348, %v2347
    %v2409 = vpack.c.bf16 %v2350, %v2349
    %v2410 = vpack.c.bf16 %v2352, %v2351
    %v2411 = vpack.c.bf16 %v2354, %v2353
    %v2412 = vpack.c.bf16 %v2356, %v2355
    %v2413 = vpack.c.bf16 %v2358, %v2357
    %v2414 = vpack.c.bf16 %v2360, %v2359
    %v2415 = vpack.c.bf16 %v2362, %v2361
    %v2416 = vpack.c.bf16 %v2364, %v2363
    %v2417 = vpack.c.bf16 %v2366, %v2365
    %v2418 = vpack.c.bf16 %v2368, %v2367
    %v2419 = vpack.c.bf16 %v2370, %v2369
    %v2420 = vpack.c.bf16 %v2372, %v2371
    %v2421 = vpack.c.bf16 %v2374, %v2373
    %v2422 = vpack.c.bf16 %v2376, %v2375
    %v2423 = vpack.c.bf16 %v2378, %v2377
    %v2424 = vpack.c.bf16 %v2380, %v2379
    %v2425 = vpack.c.bf16 %v2382, %v2381
    %v2426 = vpack.c.bf16 %v2384, %v2383
    %v2427 = vpack.c.bf16 %v2386, %v2385
    %v2428 = vpack.c.bf16 %v2388, %v2387
    %v2429 = vpack.c.bf16 %v2390, %v2389
    %v2430 = vpack.c.bf16 %v2392, %v2391
    %v2431 = vpack.c.bf16 %v2394, %v2393
    %v2432 = vpack.c.bf16 %v2396, %v2395
    %v2433 = vpack.c.bf16 %v2398, %v2397
    %v2434 = vpack.c.bf16 %v2400, %v2399
    %v2435 = vpack.c.bf16 %v2402, %v2401
    %v2436 = vpack.c.bf16 %v2404, %v2403
    %2437 = vst [vmem:[#allocation7] sm:$0xff] %v2405
    %2438 = vst [vmem:[#allocation7 + $0x8] sm:$0xff] %v2406
    %2439 = vst [vmem:[#allocation7 + $0x10] sm:$0xff] %v2407
    %2440 = vst [vmem:[#allocation7 + $0x18] sm:$0xff] %v2408
    %2441 = vst [vmem:[#allocation7 + $0x20] sm:$0xff] %v2409
    %2442 = vst [vmem:[#allocation7 + $0x28] sm:$0xff] %v2410
    %2443 = vst [vmem:[#allocation7 + $0x30] sm:$0xff] %v2411
    %2444 = vst [vmem:[#allocation7 + $0x38] sm:$0xff] %v2412
    %2445 = vst [vmem:[#allocation7 + $0x40] sm:$0xff] %v2413
    %2446 = vst [vmem:[#allocation7 + $0x48] sm:$0xff] %v2414
    %2447 = vst [vmem:[#allocation7 + $0x50] sm:$0xff] %v2415
    %2448 = vst [vmem:[#allocation7 + $0x58] sm:$0xff] %v2416
    %2449 = vst [vmem:[#allocation7 + $0x60] sm:$0xff] %v2417
    %2450 = vst [vmem:[#allocation7 + $0x68] sm:$0xff] %v2418
    %2451 = vst [vmem:[#allocation7 + $0x70] sm:$0xff] %v2419
    %2452 = vst [vmem:[#allocation7 + $0x78] sm:$0xff] %v2420
    %2453 = vst [vmem:[#allocation7 + $0x80] sm:$0xff] %v2421
    %2454 = vst [vmem:[#allocation7 + $0x88] sm:$0xff] %v2422
    %2455 = vst [vmem:[#allocation7 + $0x90] sm:$0xff] %v2423
    %2456 = vst [vmem:[#allocation7 + $0x98] sm:$0xff] %v2424
    %2457 = vst [vmem:[#allocation7 + $0xa0] sm:$0xff] %v2425
    %2458 = vst [vmem:[#allocation7 + $0xa8] sm:$0xff] %v2426
    %2459 = vst [vmem:[#allocation7 + $0xb0] sm:$0xff] %v2427
    %2460 = vst [vmem:[#allocation7 + $0xb8] sm:$0xff] %v2428
    %2461 = vst [vmem:[#allocation7 + $0xc0] sm:$0xff] %v2429
    %2462 = vst [vmem:[#allocation7 + $0xc8] sm:$0xff] %v2430
    %2463 = vst [vmem:[#allocation7 + $0xd0] sm:$0xff] %v2431
    %2464 = vst [vmem:[#allocation7 + $0xd8] sm:$0xff] %v2432
    %2465 = vst [vmem:[#allocation7 + $0xe0] sm:$0xff] %v2433
    %2466 = vst [vmem:[#allocation7 + $0xe8] sm:$0xff] %v2434
    %2467 = vst [vmem:[#allocation7 + $0xf0] sm:$0xff] %v2435
    %2468 = vst [vmem:[#allocation7 + $0xf8] sm:$0xff] %v2436
    // Predicated region
    $region30: #{space_warp.1} parent=1 // pred_check
      _
    $region31: #{space_warp.1} parent=1 // pred_check_branch
      %2470 = sbr.rel (0) target = $region33
    $region32: #{space_warp.1} parent=1 // pred_region
      %2472 = vsyncadd [#allocation4], 0
      %s2473 = sshll.u32 [#allocation7], 4
      %s2474 = int_to_ptr.vmem [resolvable:$true] %s2473
      %s2475 = sshll.u32 %s5, 4
      %s2476 = int_to_ptr.hbm [resolvable:$true] %s2475
      %2481 = dma.vmem_to_hbm [thread:$0]  %s2474, 4096, %s2476, [#allocation4], 2048, 2048, 128
    $region33: #{space_warp.1} parent=1 // pred_fallthru
      _
    // Predicated region
    $region34: #{space_warp.1} parent=1 // pred_check
      _
    $region35: #{space_warp.1} parent=1 // pred_check_branch
      %2483 = sbr.rel (0) target = $region37
    $region36: #{space_warp.1} parent=1 // pred_region
      %2485 = dma.done [#allocation4], 4096
    $region37: #{space_warp.1} parent=1 // pred_fallthru
      _
    %2486 = vsyncpa [#allocation3], 1
    %2487 = vsyncpa [#allocation6], 1
    %2488 = vsyncpa [#allocation4], 1

</llo_original>
